<compile_context>
chip_gen: v7x
topology: tpu7x:2x2x1
jax: 0.10.0
libtpu: 0.0.40
codegen_flags: <defaults>
</compile_context>

<pallas_src>
import functools

import jax
import jax.numpy as jnp
from jax import lax
from jax.experimental import pallas as pl
from jax.experimental.pallas import tpu as pltpu


def _mvsa_kernel(*refs, scale, has_bias, mm_dtype, V, tq, S, H, att):
    if has_bias:
        (q_ref, k_ref, v_ref, ab_ref,
         wqkv_ref, bqkv_ref, wo3_ref, bo_ref, out_ref) = refs
    else:
        (q_ref, k_ref, v_ref,
         wqkv_ref, bqkv_ref, wo3_ref, bo_ref, out_ref) = refs
        ab_ref = None

    def mm2(a, b):
        # plain 2-D matmul on the MXU, f32 accumulation
        return jnp.dot(a.astype(mm_dtype), b.astype(mm_dtype),
                       preferred_element_type=jnp.float32)

    def bmm(a, b, a_c, b_c):
        # view-batched matmul (batch axis 0), f32 accumulation, no transposes
        return lax.dot_general(
            a.astype(mm_dtype), b.astype(mm_dtype),
            dimension_numbers=(((a_c,), (b_c,)), ((0,), (0,))),
            preferred_element_type=jnp.float32)

    # --- Q/K/V projections, batched across ALL views in one matmul each ---
    q2 = q_ref[...].reshape(V * tq, H)          # (V*tq, H)
    k2 = k_ref[...].reshape(V * S, H)           # (V*S,  H)
    v2 = v_ref[...].reshape(V * S, H)           # (V*S,  H)

    qp = (mm2(q2, wqkv_ref[0]) + bqkv_ref[0]).reshape(V, tq, att)
    kp = (mm2(k2, wqkv_ref[1]) + bqkv_ref[1]).reshape(V, S, att)
    vp = (mm2(v2, wqkv_ref[2]) + bqkv_ref[2]).reshape(V, S, att)

    # --- scores: (V, tq, S); contract over att, no kp.T materialization ---
    s = bmm(qp * scale, kp, 2, 2)

    # --- numerically stable softmax over the key axis (kept in f32) ---
    s = s - jnp.max(s, axis=-1, keepdims=True)
    e = jnp.exp(s)
    attn = e * pl.reciprocal(jnp.sum(e, axis=-1, keepdims=True), approx=True)

    if has_bias:
        # NB: the PyTorch module adds attn_bias AFTER softmax — reproduce exactly.
        attn = attn + ab_ref[...]

    # --- context: (V, tq, att) ---
    ctx = bmm(attn, vp, 2, 1)

    # --- output projection: sum_v ctx[v] @ WoT[v*att:(v+1)*att, :], bias folded in ---
    contrib = bmm(ctx, wo3_ref[...], 2, 1)                     # (V, tq, H)
    out_ref[...] = (jnp.sum(contrib, axis=0) + bo_ref[...]).astype(out_ref.dtype)


def _pick_tq(S):
    for t in (512, 256, 128, 64, 32, 16, 8):
        if S % t == 0:
            return t
    return S


def _vmem_limit_bytes(V, S, H, att, tq, has_bias, in_itemsize):
    # double-buffered input blocks + output + rough f32 intermediates (bytes)
    in_elems = V * tq * H + 2 * V * S * H + (V * tq * S if has_bias else 0)
    w_elems = 3 * H * att + 3 * att + V * att * H + H
    inter = 4 * (2 * V * tq * S + V * (tq + 2 * S) * att + 2 * V * tq * H + tq * H)
    est = 2 * (in_elems * in_itemsize + w_elems * 4) + 2 * tq * H * 4 + inter
    # keep >= default scoped limits, and leave headroom under v7x's 64 MiB VMEM
    return int(min(max(2 * est, 32 * 2**20), 48 * 2**20))


def multi_view_self_attention(q, k, v, params, attn_bias=None, *, use_bf16=False):
    """q, k, v: (V, S, H) float32. Returns (S, H) float32."""
    V, S, H = q.shape
    att = H // V
    assert V * att == H, "hidden_size must be divisible by view_size"
    scale = float(att) ** (-0.5)

    # Host-side weight prep: stack the (shared-across-views) projection weights
    # and pre-transpose so the kernel only does (M,H)@(H,att) / (tq,att)@(att,H).
    wqkvT = jnp.stack([params["wq"].T, params["wk"].T, params["wv"].T])      # (3, H, att)
    bqkv = jnp.stack([params["bq"], params["bk"], params["bv"]])[:, None, :]  # (3, 1, att)
    wo3 = params["wo"].T.reshape(V, att, H)                                   # (V, att, H)
    bo2 = params["bo"].reshape(1, H)

    mm_dtype = jnp.bfloat16 if use_bf16 else jnp.float32
    if use_bf16:
        # MXU operands in bf16 (halves DMA bytes); accumulation & softmax stay f32.
        q = q.astype(jnp.bfloat16)
        k = k.astype(jnp.bfloat16)
        v = v.astype(jnp.bfloat16)
        wqkvT = wqkvT.astype(jnp.bfloat16)
        wo3 = wo3.astype(jnp.bfloat16)

    tq = _pick_tq(S)
    grid = (S // tq,)
    has_bias = attn_bias is not None

    in_specs = [
        pl.BlockSpec((V, tq, H), lambda i: (0, i, 0)),   # q  (per q-tile)
        pl.BlockSpec((V, S, H), lambda i: (0, 0, 0)),    # k  (all keys)
        pl.BlockSpec((V, S, H), lambda i: (0, 0, 0)),    # v  (all values)
    ]
    inputs = [q, k, v]
    if has_bias:
        in_specs.append(pl.BlockSpec((V, tq, S), lambda i: (0, i, 0)))
        inputs.append(attn_bias.astype(jnp.float32))
    in_specs += [
        pl.BlockSpec((3, H, att), lambda i: (0, 0, 0)),  # stacked WqT/WkT/WvT
        pl.BlockSpec((3, 1, att), lambda i: (0, 0, 0)),  # stacked bq/bk/bv
        pl.BlockSpec((V, att, H), lambda i: (0, 0, 0)),  # WoT reshaped per view
        pl.BlockSpec((1, H), lambda i: (0, 0)),          # bo
    ]
    inputs += [wqkvT, bqkv, wo3, bo2]

    kernel = functools.partial(
        _mvsa_kernel, scale=scale, has_bias=has_bias, mm_dtype=mm_dtype,
        V=V, tq=tq, S=S, H=H, att=att)

    vmem_limit = _vmem_limit_bytes(V, S, H, att, tq, has_bias,
                                   jnp.dtype(q.dtype).itemsize)

    return pl.pallas_call(
        kernel,
        out_shape=jax.ShapeDtypeStruct((S, H), jnp.float32),
        grid_spec=pltpu.PrefetchScalarGridSpec(
            num_scalar_prefetch=0,
            grid=grid,
            in_specs=in_specs,
            out_specs=pl.BlockSpec((tq, H), lambda i: (i, 0)),
        ),
        compiler_params=pltpu.CompilerParams(
            dimension_semantics=("parallel",),
            vmem_limit_bytes=vmem_limit),
    )(*inputs)


def _reference(q, k, v, params, attn_bias=None):
    """Pure-JAX transcription of the PyTorch forward (eval mode)."""
    V, S, H = q.shape
    att = H // V
    scale = float(att) ** (-0.5)
    qp = jnp.einsum("vsh,ah->vsa", q, params["wq"]) + params["bq"]
    kp = jnp.einsum("vsh,ah->vsa", k, params["wk"]) + params["bk"]
    vp = jnp.einsum("vsh,ah->vsa", v, params["wv"]) + params["bv"]
    x = jnp.einsum("vsa,vta->vst", qp * scale, kp)
    x = jax.nn.softmax(x, axis=2)
    if attn_bias is not None:
        x = x + attn_bias
    x = jnp.einsum("vst,vta->vsa", x, vp)
    x = jnp.transpose(x, (1, 0, 2)).reshape(S, V * att)
    return x @ params["wo"].T + params["bo"]


def _init_params(key, hidden_size, view_size):
    att = hidden_size // view_size
    ks = jax.random.split(key, 8)
    mk = lambda k, shape: (0.1 * jax.random.normal(k, shape)).astype(jnp.float32)
    return {
        "wq": mk(ks[0], (att, hidden_size)), "bq": mk(ks[1], (att,)),
        "wk": mk(ks[2], (att, hidden_size)), "bk": mk(ks[3], (att,)),
        "wv": mk(ks[4], (att, hidden_size)), "bv": mk(ks[5], (att,)),
        "wo": mk(ks[6], (hidden_size, view_size * att)), "bo": mk(ks[7], (hidden_size,)),
    }


if __name__ == "__main__":
    hidden_size = 32
    view_size = 4
    seq = 8

    key = jax.random.PRNGKey(0)
    kq, kk, kv, kp_, kb = jax.random.split(key, 5)
    q = jax.random.normal(kq, (view_size, seq, hidden_size), jnp.float32)
    k = jax.random.normal(kk, (view_size, seq, hidden_size), jnp.float32)
    v = jax.random.normal(kv, (view_size, seq, hidden_size), jnp.float32)
    params = _init_params(kp_, hidden_size, view_size)
    bias = (0.1 * jax.random.normal(kb, (view_size, seq, seq))).astype(jnp.float32)

    # 1) f32 path, no attention bias (bias input is dropped entirely, not zero-filled).
    out = multi_view_self_attention(q, k, v, params)
    jax.block_until_ready(out)
    ref = _reference(q, k, v, params)
    assert out.shape == (seq, hidden_size)
    # approx reciprocal in the softmax -> slightly looser than 1e-4
    assert jnp.allclose(out, ref, rtol=2e-3, atol=2e-3), "f32 (no bias) mismatch"

    # 2) f32 path, with post-softmax attention bias (second kernel specialization).
    out_b = multi_view_self_attention(q, k, v, params, attn_bias=bias)
    jax.block_until_ready(out_b)
    ref_b = _reference(q, k, v, params, attn_bias=bias)
    assert jnp.allclose(out_b, ref_b, rtol=2e-3, atol=2e-3), "f32 (bias) mismatch"

    # 3) bf16 MXU operands (f32 accumulation, f32 softmax) — v5e/v6e/v7x fast path.
    out_h = multi_view_self_attention(q, k, v, params, use_bf16=True)
    jax.block_until_ready(out_h)
    assert jnp.allclose(out_h, ref, rtol=3e-2, atol=3e-2), "bf16 path mismatch"

    print("KERNEL_OK")
</pallas_src>

<mosaic_0001>
module attributes {stable_mosaic.version = 11 : i64} {
  func.func @_mvsa_kernel(%arg0: i32, %arg1: memref<4x8x32xf32, #tpu.memory_space<vmem>>, %arg2: memref<4x8x32xf32, #tpu.memory_space<vmem>>, %arg3: memref<4x8x32xf32, #tpu.memory_space<vmem>>, %arg4: memref<3x32x8xf32, #tpu.memory_space<vmem>>, %arg5: memref<3x1x8xf32, #tpu.memory_space<vmem>>, %arg6: memref<4x8x32xf32, #tpu.memory_space<vmem>>, %arg7: memref<1x32xf32, #tpu.memory_space<vmem>>, %arg8: memref<8x32xf32, #tpu.memory_space<vmem>>) attributes {dimension_semantics = [#tpu.dimension_semantics<parallel>], iteration_bounds = array<i64: 1>, scalar_prefetch = 0 : i64, scratch_operands = 0 : i64, tpu.core_type = #tpu.core_type<tc>, window_params = [{transform_indices = @transform_0, window_bounds = array<i64: 4, 8, 32>}, {pipeline_mode = #tpu.pipeline_mode<synchronous>, transform_indices = @transform_1, window_bounds = array<i64: 4, 8, 32>}, {pipeline_mode = #tpu.pipeline_mode<synchronous>, transform_indices = @transform_2, window_bounds = array<i64: 4, 8, 32>}, {pipeline_mode = #tpu.pipeline_mode<synchronous>, transform_indices = @transform_3, window_bounds = array<i64: 3, 32, 8>}, {pipeline_mode = #tpu.pipeline_mode<synchronous>, transform_indices = @transform_4, window_bounds = array<i64: 3, 1, 8>}, {pipeline_mode = #tpu.pipeline_mode<synchronous>, transform_indices = @transform_5, window_bounds = array<i64: 4, 8, 32>}, {pipeline_mode = #tpu.pipeline_mode<synchronous>, transform_indices = @transform_6, window_bounds = array<i64: 1, 32>}, {transform_indices = @transform_7, window_bounds = array<i64: 8, 32>}]} {
    %c0 = arith.constant 0 : index
    %c0_0 = arith.constant 0 : index
    %c0_1 = arith.constant 0 : index
    %0 = vector.load %arg1[%c0, %c0_0, %c0_1] : memref<4x8x32xf32, #tpu.memory_space<vmem>>, vector<4x8x32xf32>
    %1 = vector.shape_cast %0 : vector<4x8x32xf32> to vector<32x32xf32>
    %c0_2 = arith.constant 0 : index
    %c0_3 = arith.constant 0 : index
    %c0_4 = arith.constant 0 : index
    %2 = vector.load %arg2[%c0_2, %c0_3, %c0_4] : memref<4x8x32xf32, #tpu.memory_space<vmem>>, vector<4x8x32xf32>
    %3 = vector.shape_cast %2 : vector<4x8x32xf32> to vector<32x32xf32>
    %c0_5 = arith.constant 0 : index
    %c0_6 = arith.constant 0 : index
    %c0_7 = arith.constant 0 : index
    %4 = vector.load %arg3[%c0_5, %c0_6, %c0_7] : memref<4x8x32xf32, #tpu.memory_space<vmem>>, vector<4x8x32xf32>
    %5 = vector.shape_cast %4 : vector<4x8x32xf32> to vector<32x32xf32>
    %c0_8 = arith.constant 0 : index
    %c0_9 = arith.constant 0 : index
    %c0_10 = arith.constant 0 : index
    %6 = vector.load %arg4[%c0_8, %c0_9, %c0_10] : memref<3x32x8xf32, #tpu.memory_space<vmem>>, vector<1x32x8xf32>
    %7 = vector.shape_cast %6 : vector<1x32x8xf32> to vector<32x8xf32>
    %cst = arith.constant dense<0.000000e+00> : vector<32x8xf32>
    %8 = tpu.matmul %1, %7, %cst {dimension_numbers = #tpu.dot_dimension_numbers<[1], [0], [0], [1], [0, 0, 1, 1], [], []>} : vector<32x32xf32>, vector<32x8xf32>, vector<32x8xf32> -> vector<32x8xf32>
    %c0_11 = arith.constant 0 : index
    %c0_12 = arith.constant 0 : index
    %c0_13 = arith.constant 0 : index
    %9 = vector.load %arg5[%c0_11, %c0_12, %c0_13] : memref<3x1x8xf32, #tpu.memory_space<vmem>>, vector<1x1x8xf32>
    %10 = vector.shape_cast %9 : vector<1x1x8xf32> to vector<1x8xf32>
    %11 = vector.broadcast %10 : vector<1x8xf32> to vector<32x8xf32>
    %12 = arith.addf %8, %11 : vector<32x8xf32>
    %13 = vector.shape_cast %12 : vector<32x8xf32> to vector<4x8x8xf32>
    %c1 = arith.constant 1 : index
    %c0_14 = arith.constant 0 : index
    %c0_15 = arith.constant 0 : index
    %14 = vector.load %arg4[%c1, %c0_14, %c0_15] : memref<3x32x8xf32, #tpu.memory_space<vmem>>, vector<1x32x8xf32>
    %15 = vector.shape_cast %14 : vector<1x32x8xf32> to vector<32x8xf32>
    %cst_16 = arith.constant dense<0.000000e+00> : vector<32x8xf32>
    %16 = tpu.matmul %3, %15, %cst_16 {dimension_numbers = #tpu.dot_dimension_numbers<[1], [0], [0], [1], [0, 0, 1, 1], [], []>} : vector<32x32xf32>, vector<32x8xf32>, vector<32x8xf32> -> vector<32x8xf32>
    %c1_17 = arith.constant 1 : index
    %c0_18 = arith.constant 0 : index
    %c0_19 = arith.constant 0 : index
    %17 = vector.load %arg5[%c1_17, %c0_18, %c0_19] : memref<3x1x8xf32, #tpu.memory_space<vmem>>, vector<1x1x8xf32>
    %18 = vector.shape_cast %17 : vector<1x1x8xf32> to vector<1x8xf32>
    %19 = vector.broadcast %18 : vector<1x8xf32> to vector<32x8xf32>
    %20 = arith.addf %16, %19 : vector<32x8xf32>
    %21 = vector.shape_cast %20 : vector<32x8xf32> to vector<4x8x8xf32>
    %c2 = arith.constant 2 : index
    %c0_20 = arith.constant 0 : index
    %c0_21 = arith.constant 0 : index
    %22 = vector.load %arg4[%c2, %c0_20, %c0_21] : memref<3x32x8xf32, #tpu.memory_space<vmem>>, vector<1x32x8xf32>
    %23 = vector.shape_cast %22 : vector<1x32x8xf32> to vector<32x8xf32>
    %cst_22 = arith.constant dense<0.000000e+00> : vector<32x8xf32>
    %24 = tpu.matmul %5, %23, %cst_22 {dimension_numbers = #tpu.dot_dimension_numbers<[1], [0], [0], [1], [0, 0, 1, 1], [], []>} : vector<32x32xf32>, vector<32x8xf32>, vector<32x8xf32> -> vector<32x8xf32>
    %c2_23 = arith.constant 2 : index
    %c0_24 = arith.constant 0 : index
    %c0_25 = arith.constant 0 : index
    %25 = vector.load %arg5[%c2_23, %c0_24, %c0_25] : memref<3x1x8xf32, #tpu.memory_space<vmem>>, vector<1x1x8xf32>
    %26 = vector.shape_cast %25 : vector<1x1x8xf32> to vector<1x8xf32>
    %27 = vector.broadcast %26 : vector<1x8xf32> to vector<32x8xf32>
    %28 = arith.addf %24, %27 : vector<32x8xf32>
    %29 = vector.shape_cast %28 : vector<32x8xf32> to vector<4x8x8xf32>
    %cst_26 = arith.constant 0.353553385 : f32
    %30 = vector.broadcast %cst_26 : f32 to vector<4x8x8xf32>
    %31 = arith.mulf %13, %30 : vector<4x8x8xf32>
    %cst_27 = arith.constant dense<0.000000e+00> : vector<4x8x8xf32>
    %32 = tpu.matmul %31, %21, %cst_27 {dimension_numbers = #tpu.dot_dimension_numbers<[2], [2], [1], [1], [0, 0, 0, 1, 1, 1], [0], [0]>} : vector<4x8x8xf32>, vector<4x8x8xf32>, vector<4x8x8xf32> -> vector<4x8x8xf32>
    %cst_28 = arith.constant dense<0xFF800000> : vector<4x8xf32>
    %33 = vector.multi_reduction <maximumf>, %32, %cst_28 [2] : vector<4x8x8xf32> to vector<4x8xf32>
    %34 = vector.shape_cast %33 : vector<4x8xf32> to vector<4x8x1xf32>
    %35 = vector.broadcast %34 : vector<4x8x1xf32> to vector<4x8x8xf32>
    %36 = arith.subf %32, %35 : vector<4x8x8xf32>
    %37 = math.exp %36 : vector<4x8x8xf32>
    %cst_29 = arith.constant dense<0.000000e+00> : vector<4x8xf32>
    %38 = vector.multi_reduction <add>, %37, %cst_29 [2] : vector<4x8x8xf32> to vector<4x8xf32>
    %39 = vector.shape_cast %38 : vector<4x8xf32> to vector<4x8x1xf32>
    %40 = tpu.reciprocal %39 {approx = true} : vector<4x8x1xf32> -> vector<4x8x1xf32>
    %41 = vector.broadcast %40 : vector<4x8x1xf32> to vector<4x8x8xf32>
    %42 = arith.mulf %37, %41 : vector<4x8x8xf32>
    %cst_30 = arith.constant dense<0.000000e+00> : vector<4x8x8xf32>
    %43 = tpu.matmul %42, %29, %cst_30 {dimension_numbers = #tpu.dot_dimension_numbers<[2], [1], [1], [2], [0, 0, 0, 1, 1, 2], [0], [0]>} : vector<4x8x8xf32>, vector<4x8x8xf32>, vector<4x8x8xf32> -> vector<4x8x8xf32>
    %c0_31 = arith.constant 0 : index
    %c0_32 = arith.constant 0 : index
    %c0_33 = arith.constant 0 : index
    %44 = vector.load %arg6[%c0_31, %c0_32, %c0_33] : memref<4x8x32xf32, #tpu.memory_space<vmem>>, vector<4x8x32xf32>
    %cst_34 = arith.constant dense<0.000000e+00> : vector<4x8x32xf32>
    %45 = tpu.matmul %43, %44, %cst_34 {dimension_numbers = #tpu.dot_dimension_numbers<[2], [1], [1], [2], [0, 0, 0, 1, 1, 2], [0], [0]>} : vector<4x8x8xf32>, vector<4x8x32xf32>, vector<4x8x32xf32> -> vector<4x8x32xf32>
    %cst_35 = arith.constant dense<0.000000e+00> : vector<8x32xf32>
    %46 = vector.multi_reduction <add>, %45, %cst_35 [0] : vector<4x8x32xf32> to vector<8x32xf32>
    %c0_36 = arith.constant 0 : index
    %c0_37 = arith.constant 0 : index
    %47 = vector.load %arg7[%c0_36, %c0_37] : memref<1x32xf32, #tpu.memory_space<vmem>>, vector<1x32xf32>
    %48 = vector.broadcast %47 : vector<1x32xf32> to vector<8x32xf32>
    %49 = arith.addf %46, %48 : vector<8x32xf32>
    %c0_38 = arith.constant 0 : index
    %c0_39 = arith.constant 0 : index
    %50 = vector.load %arg8[%c0_38, %c0_39] : memref<8x32xf32, #tpu.memory_space<vmem>>, vector<8x32xf32>
    tpu.vector_store %arg8[%c0_38, %c0_39], %49 {strides = array<i32>} : memref<8x32xf32, #tpu.memory_space<vmem>>, vector<8x32xf32>,
    return
  }
  func.func @transform_0(%arg0: i32) -> (i32, i32, i32) {
    %c0_i32 = arith.constant 0 : i32
    %c0_i32_0 = arith.constant 0 : i32
    %c0_i32_1 = arith.constant 0 : i32
    return %c0_i32, %arg0, %c0_i32_0 : i32, i32, i32
  }
  func.func @transform_1(%arg0: i32) -> (i32, i32, i32) {
    %c0_i32 = arith.constant 0 : i32
    %c0_i32_0 = arith.constant 0 : i32
    %c0_i32_1 = arith.constant 0 : i32
    %c0_i32_2 = arith.constant 0 : i32
    return %c0_i32, %c0_i32_0, %c0_i32_1 : i32, i32, i32
  }
  func.func @transform_2(%arg0: i32) -> (i32, i32, i32) {
    %c0_i32 = arith.constant 0 : i32
    %c0_i32_0 = arith.constant 0 : i32
    %c0_i32_1 = arith.constant 0 : i32
    %c0_i32_2 = arith.constant 0 : i32
    return %c0_i32, %c0_i32_0, %c0_i32_1 : i32, i32, i32
  }
  func.func @transform_3(%arg0: i32) -> (i32, i32, i32) {
    %c0_i32 = arith.constant 0 : i32
    %c0_i32_0 = arith.constant 0 : i32
    %c0_i32_1 = arith.constant 0 : i32
    %c0_i32_2 = arith.constant 0 : i32
    return %c0_i32, %c0_i32_0, %c0_i32_1 : i32, i32, i32
  }
  func.func @transform_4(%arg0: i32) -> (i32, i32, i32) {
    %c0_i32 = arith.constant 0 : i32
    %c0_i32_0 = arith.constant 0 : i32
    %c0_i32_1 = arith.constant 0 : i32
    %c0_i32_2 = arith.constant 0 : i32
    return %c0_i32, %c0_i32_0, %c0_i32_1 : i32, i32, i32
  }
  func.func @transform_5(%arg0: i32) -> (i32, i32, i32) {
    %c0_i32 = arith.constant 0 : i32
    %c0_i32_0 = arith.constant 0 : i32
    %c0_i32_1 = arith.constant 0 : i32
    %c0_i32_2 = arith.constant 0 : i32
    return %c0_i32, %c0_i32_0, %c0_i32_1 : i32, i32, i32
  }
  func.func @transform_6(%arg0: i32) -> (i32, i32) {
    %c0_i32 = arith.constant 0 : i32
    %c0_i32_0 = arith.constant 0 : i32
    %c0_i32_1 = arith.constant 0 : i32
    return %c0_i32, %c0_i32_0 : i32, i32
  }
  func.func @transform_7(%arg0: i32) -> (i32, i32) {
    %c0_i32 = arith.constant 0 : i32
    %c0_i32_0 = arith.constant 0 : i32
    return %arg0, %c0_i32 : i32, i32
  }
}

</mosaic_0001>

<llo_original>
// kernel: tpu_custom_call.1
$region0: #{tpu_custom_call.1}
  #allocation0 [shape = 'u32[]', space=smem, size = 0x4, offset = 0x4, fixed_abs, tag = 'smem constant byte address 0x4 - core index']
  #allocation1 [shape = 'u32[144,128]{1,0:T(1,128)}', space=vmem, size = 0x12000, scoped, tag = 'internal scratch']
  %s0 = inlined_call_operand.vmem [shape: f32[4,8,32], index: 0, kind: input, shape index: {}]
  %s1 = inlined_call_operand.vmem [shape: f32[4,8,32], index: 1, kind: input, shape index: {}]
  %s2 = inlined_call_operand.vmem [shape: f32[4,8,32], index: 2, kind: input, shape index: {}]
  %s3 = inlined_call_operand.vmem [shape: f32[3,32,8], index: 3, kind: input, shape index: {}]
  %s4 = inlined_call_operand.vmem [shape: f32[3,1,8], index: 4, kind: input, shape index: {}]
  %s5 = inlined_call_operand.vmem [shape: f32[4,8,32], index: 5, kind: input, shape index: {}]
  %s6 = inlined_call_operand.vmem [shape: f32[1,32], index: 6, kind: input, shape index: {}]
  %s7 = inlined_call_operand.hbm [shape: f32[8,32], index: 7, kind: output, shape index: {}]
  %s8 = sld [smem:[#allocation0]]
  $region38: #{tpu_custom_call.1} parent=0
    _
  %s10 = ssub.s32 1, %s8
  %s11 = scalar_select 0, %s10, %s8
  $region1: #{tpu_custom_call.1} parent=0
    #allocation2 [shape = 'u8[4096]{0}', space=vmem, size = 0x1000, scoped, tag = 'output window, operand 0, single buffered']
    #allocation3 [shape = 's32[1]{0}', space=sflag, size = 0x4, scoped, tag = 'scoped memory for tpu_custom_call.1']
    %12 = vsyncpa [#allocation3], 0
    // Predicated region
    $region2: #{tpu_custom_call.1} parent=1 // pred_check
      _
    $region3: #{tpu_custom_call.1} parent=1 // pred_check_branch
      %14 = sbr.rel (0) target = $region5
    $region4: #{tpu_custom_call.1} parent=1 // pred_region
      _
    $region5: #{tpu_custom_call.1} parent=1 // pred_fallthru
      _
    // Predicated region
    $region6: #{tpu_custom_call.1} parent=1 // pred_check
      _
    $region7: #{tpu_custom_call.1} parent=1 // pred_check_branch
      %16 = sbr.rel (0) target = $region9
    $region8: #{tpu_custom_call.1} parent=1 // pred_region
      _
    $region9: #{tpu_custom_call.1} parent=1 // pred_fallthru
      _
    // Predicated region
    $region10: #{tpu_custom_call.1} parent=1 // pred_check
      _
    $region11: #{tpu_custom_call.1} parent=1 // pred_check_branch
      %18 = sbr.rel (0) target = $region13
    $region12: #{tpu_custom_call.1} parent=1 // pred_region
      _
    $region13: #{tpu_custom_call.1} parent=1 // pred_fallthru
      _
    // Predicated region
    $region14: #{tpu_custom_call.1} parent=1 // pred_check
      _
    $region15: #{tpu_custom_call.1} parent=1 // pred_check_branch
      %20 = sbr.rel (0) target = $region17
    $region16: #{tpu_custom_call.1} parent=1 // pred_region
      _
    $region17: #{tpu_custom_call.1} parent=1 // pred_fallthru
      _
    // Predicated region
    $region18: #{tpu_custom_call.1} parent=1 // pred_check
      _
    $region19: #{tpu_custom_call.1} parent=1 // pred_check_branch
      %22 = sbr.rel (0) target = $region21
    $region20: #{tpu_custom_call.1} parent=1 // pred_region
      _
    $region21: #{tpu_custom_call.1} parent=1 // pred_fallthru
      _
    // Predicated region
    $region22: #{tpu_custom_call.1} parent=1 // pred_check
      _
    $region23: #{tpu_custom_call.1} parent=1 // pred_check_branch
      %24 = sbr.rel (0) target = $region25
    $region24: #{tpu_custom_call.1} parent=1 // pred_region
      _
    $region25: #{tpu_custom_call.1} parent=1 // pred_fallthru
      _
    // Predicated region
    $region26: #{tpu_custom_call.1} parent=1 // pred_check
      _
    $region27: #{tpu_custom_call.1} parent=1 // pred_check_branch
      %26 = sbr.rel (0) target = $region29
    $region28: #{tpu_custom_call.1} parent=1 // pred_region
      _
    $region29: #{tpu_custom_call.1} parent=1 // pred_fallthru
      _
    %v27 = vld [vmem:[%s0] sm:$0xff]
    %v28 = vld [vmem:[%s0 + $0x8] sm:$0xff]
    %v29 = vld [vmem:[%s0 + $0x10] sm:$0xff]
    %v30 = vld [vmem:[%s0 + $0x18] sm:$0xff]
    %v31 = vld [vmem:[%s1] sm:$0xff]
    %v32 = vld [vmem:[%s1 + $0x8] sm:$0xff]
    %v33 = vld [vmem:[%s1 + $0x10] sm:$0xff]
    %v34 = vld [vmem:[%s1 + $0x18] sm:$0xff]
    %v35 = vld [vmem:[%s2] sm:$0xff]
    %v36 = vld [vmem:[%s2 + $0x8] sm:$0xff]
    %v37 = vld [vmem:[%s2 + $0x10] sm:$0xff]
    %v38 = vld [vmem:[%s2 + $0x18] sm:$0xff]
    %v39 = vld [vmem:[%s3] sm:$0xff]
    %v40 = vld [vmem:[%s3 + $0x8] sm:$0xff]
    %v41 = vld [vmem:[%s3 + $0x10] sm:$0xff]
    %v42 = vld [vmem:[%s3 + $0x18] sm:$0xff]
    %v43 = vld [vmem:[%s4] sm:$0x1]
    %v45 = vlaneseq
    %v46 = vshrl.u32 %v45, 7
    %v47 = vsub.s32 0, %v46
    %v48 = vrot.slane %v43, %v47
    %vm50 = vcmask 261120
    %v52 = vsel %vm50, %v27, 0
    %v55 = vsel %vm50, %v28, 0
    %v58 = vsel %vm50, %v29, 0
    %v61 = vsel %vm50, %v30, 0
    %63 = vmatprep.subr.mxu0 0.0
    %64 = vmatpush1.msra.mxu0 %v39
    %65 = vmatprep.subr.mxu0 0.0
    %66 = vmatpush1.msra.mxu0 %v40
    %67 = vmatprep.subr.mxu0 0.0
    %68 = vmatpush1.msra.mxu0 %v41
    %69 = vmatprep.subr.mxu0 0.0
    %70 = vmatpush1.msra.mxu0 %v42
    %71 = vmatprep.subr.mxu0 0.0
    %72 = vmatpush1.msra.mxu0 0.0
    %73 = vmatprep.subr.mxu0 0.0
    %74 = vmatpush1.msra.mxu0 0.0
    %75 = vmatprep.subr.mxu0 0.0
    %76 = vmatpush1.msra.mxu0 0.0
    %77 = vmatprep.subr.mxu0 0.0
    %78 = vmatpush1.msra.mxu0 0.0
    %79 = vmatprep.subr.mxu0 0.0
    %80 = vmatpush1.msra.mxu0 0.0
    %81 = vmatprep.subr.mxu0 0.0
    %82 = vmatpush1.msra.mxu0 0.0
    %83 = vmatprep.subr.mxu0 0.0
    %84 = vmatpush1.msra.mxu0 0.0
    %85 = vmatprep.subr.mxu0 0.0
    %86 = vmatpush1.msra.mxu0 0.0
    %87 = vmatprep.subr.mxu0 0.0
    %88 = vmatpush1.msra.mxu0 0.0
    %89 = vmatprep.subr.mxu0 0.0
    %90 = vmatpush1.msra.mxu0 0.0
    %91 = vmatprep.subr.mxu0 0.0
    %92 = vmatpush1.msra.mxu0 0.0
    %93 = vmatprep.subr.mxu0 0.0
    %94 = vmatpush1.msra.mxu0 0.0
    %95 = vmatprep.subr.mxu0 0.0
    %96 = vmatpush1.msra.mxu0 0.0
    %97 = vmatprep.subr.mxu0 0.0
    %98 = vmatpush1.msra.mxu0 0.0
    %99 = vmatprep.subr.mxu0 0.0
    %100 = vmatpush1.msra.mxu0 0.0
    %101 = vmatprep.subr.mxu0 0.0
    %102 = vmatpush1.msra.mxu0 0.0
    %103 = vmatprep.subr.mxu0 0.0
    %104 = vmatpush1.msra.mxu0 0.0
    %105 = vmatprep.subr.mxu0 0.0
    %106 = vmatpush1.msra.mxu0 0.0
    %107 = vmatprep.subr.mxu0 0.0
    %108 = vmatpush1.msra.mxu0 0.0
    %109 = vmatprep.subr.mxu0 0.0
    %110 = vmatpush1.msra.mxu0 0.0
    %111 = vmatprep.subr.mxu0 0.0
    %112 = vmatpush1.msra.mxu0 0.0
    %113 = vmatprep.subr.mxu0 0.0
    %114 = vmatpush1.msra.mxu0 0.0
    %115 = vmatprep.subr.mxu0 0.0
    %116 = vmatpush1.msra.mxu0 0.0
    %117 = vmatprep.subr.mxu0 0.0
    %118 = vmatpush1.msra.mxu0 0.0
    %119 = vmatprep.subr.mxu0 0.0
    %120 = vmatpush1.msra.mxu0 0.0
    %121 = vmatprep.subr.mxu0 0.0
    %122 = vmatpush1.msra.mxu0 0.0
    %123 = vmatprep.subr.mxu0 0.0
    %124 = vmatpush1.msra.mxu0 0.0
    %125 = vmatprep.subr.mxu0 0.0
    %126 = vmatpush1.msra.mxu0 0.0
    %127 = vmatprep.mubr.f32.mxu0 0.0
    %128 = vmatmul.mubr.f32.gmra.mrb[0].mxu0 %v52
    %v129 = vpop.f32.mrb[0].mxu0
    %v130 = vadd.f32 %v48, %v129
    %v131 = vpop.f32.mrb[0].mxu0
    %132 = vmatprep.mubr.f32.mxu0 0.0
    %133 = vmatmul.mubr.f32.gmra.mrb[0].mxu0 %v55
    %v134 = vpop.f32.mrb[0].mxu0
    %v135 = vadd.f32 %v48, %v134
    %v136 = vpop.f32.mrb[0].mxu0
    %137 = vmatprep.mubr.f32.mxu0 0.0
    %138 = vmatmul.mubr.f32.gmra.mrb[0].mxu0 %v58
    %v139 = vpop.f32.mrb[0].mxu0
    %v140 = vadd.f32 %v48, %v139
    %v141 = vpop.f32.mrb[0].mxu0
    %142 = vmatprep.mubr.f32.mxu0 0.0
    %143 = vmatmul.mubr.f32.gmra.mrb[0].mxu0 %v61
    %v144 = vpop.f32.mrb[0].mxu0
    %v145 = vadd.f32 %v48, %v144
    %v146 = vpop.f32.mrb[0].mxu0
    %147 = vdwg.mxu0
    %s148 = scalar_lea.vmem %s3, 32
    %v149 = vld [vmem:[%s148] sm:$0xff]
    %v150 = vld [vmem:[%s148 + $0x8] sm:$0xff]
    %v151 = vld [vmem:[%s148 + $0x10] sm:$0xff]
    %v152 = vld [vmem:[%s148 + $0x18] sm:$0xff]
    %s153 = scalar_lea.vmem %s4, 1
    %v154 = vld [vmem:[%s153] sm:$0x1]
    %v156 = vlaneseq
    %v157 = vshrl.u32 %v156, 7
    %v158 = vsub.s32 0, %v157
    %v159 = vrot.slane %v154, %v158
    %v162 = vsel %vm50, %v31, 0
    %v165 = vsel %vm50, %v32, 0
    %v168 = vsel %vm50, %v33, 0
    %v171 = vsel %vm50, %v34, 0
    %173 = vmatprep.subr.mxu0 0.0
    %174 = vmatpush1.msra.mxu0 %v149
    %175 = vmatprep.subr.mxu0 0.0
    %176 = vmatpush1.msra.mxu0 %v150
    %177 = vmatprep.subr.mxu0 0.0
    %178 = vmatpush1.msra.mxu0 %v151
    %179 = vmatprep.subr.mxu0 0.0
    %180 = vmatpush1.msra.mxu0 %v152
    %181 = vmatprep.subr.mxu0 0.0
    %182 = vmatpush1.msra.mxu0 0.0
    %183 = vmatprep.subr.mxu0 0.0
    %184 = vmatpush1.msra.mxu0 0.0
    %185 = vmatprep.subr.mxu0 0.0
    %186 = vmatpush1.msra.mxu0 0.0
    %187 = vmatprep.subr.mxu0 0.0
    %188 = vmatpush1.msra.mxu0 0.0
    %189 = vmatprep.subr.mxu0 0.0
    %190 = vmatpush1.msra.mxu0 0.0
    %191 = vmatprep.subr.mxu0 0.0
    %192 = vmatpush1.msra.mxu0 0.0
    %193 = vmatprep.subr.mxu0 0.0
    %194 = vmatpush1.msra.mxu0 0.0
    %195 = vmatprep.subr.mxu0 0.0
    %196 = vmatpush1.msra.mxu0 0.0
    %197 = vmatprep.subr.mxu0 0.0
    %198 = vmatpush1.msra.mxu0 0.0
    %199 = vmatprep.subr.mxu0 0.0
    %200 = vmatpush1.msra.mxu0 0.0
    %201 = vmatprep.subr.mxu0 0.0
    %202 = vmatpush1.msra.mxu0 0.0
    %203 = vmatprep.subr.mxu0 0.0
    %204 = vmatpush1.msra.mxu0 0.0
    %205 = vmatprep.subr.mxu0 0.0
    %206 = vmatpush1.msra.mxu0 0.0
    %207 = vmatprep.subr.mxu0 0.0
    %208 = vmatpush1.msra.mxu0 0.0
    %209 = vmatprep.subr.mxu0 0.0
    %210 = vmatpush1.msra.mxu0 0.0
    %211 = vmatprep.subr.mxu0 0.0
    %212 = vmatpush1.msra.mxu0 0.0
    %213 = vmatprep.subr.mxu0 0.0
    %214 = vmatpush1.msra.mxu0 0.0
    %215 = vmatprep.subr.mxu0 0.0
    %216 = vmatpush1.msra.mxu0 0.0
    %217 = vmatprep.subr.mxu0 0.0
    %218 = vmatpush1.msra.mxu0 0.0
    %219 = vmatprep.subr.mxu0 0.0
    %220 = vmatpush1.msra.mxu0 0.0
    %221 = vmatprep.subr.mxu0 0.0
    %222 = vmatpush1.msra.mxu0 0.0
    %223 = vmatprep.subr.mxu0 0.0
    %224 = vmatpush1.msra.mxu0 0.0
    %225 = vmatprep.subr.mxu0 0.0
    %226 = vmatpush1.msra.mxu0 0.0
    %227 = vmatprep.subr.mxu0 0.0
    %228 = vmatpush1.msra.mxu0 0.0
    %229 = vmatprep.subr.mxu0 0.0
    %230 = vmatpush1.msra.mxu0 0.0
    %231 = vmatprep.subr.mxu0 0.0
    %232 = vmatpush1.msra.mxu0 0.0
    %233 = vmatprep.subr.mxu0 0.0
    %234 = vmatpush1.msra.mxu0 0.0
    %235 = vmatprep.subr.mxu0 0.0
    %236 = vmatpush1.msra.mxu0 0.0
    %237 = vmatprep.mubr.f32.mxu0 0.0
    %238 = vmatmul.mubr.f32.gmra.mrb[0].mxu0 %v162
    %v239 = vpop.f32.mrb[0].mxu0
    %v240 = vadd.f32 %v159, %v239
    %v241 = vpop.f32.mrb[0].mxu0
    %242 = vmatprep.mubr.f32.mxu0 0.0
    %243 = vmatmul.mubr.f32.gmra.mrb[0].mxu0 %v165
    %v244 = vpop.f32.mrb[0].mxu0
    %v245 = vadd.f32 %v159, %v244
    %v246 = vpop.f32.mrb[0].mxu0
    %247 = vmatprep.mubr.f32.mxu0 0.0
    %248 = vmatmul.mubr.f32.gmra.mrb[0].mxu0 %v168
    %v249 = vpop.f32.mrb[0].mxu0
    %v250 = vadd.f32 %v159, %v249
    %v251 = vpop.f32.mrb[0].mxu0
    %252 = vmatprep.mubr.f32.mxu0 0.0
    %253 = vmatmul.mubr.f32.gmra.mrb[0].mxu0 %v171
    %v254 = vpop.f32.mrb[0].mxu0
    %v255 = vadd.f32 %v159, %v254
    %v256 = vpop.f32.mrb[0].mxu0
    %257 = vdwg.mxu0
    %s258 = scalar_lea.vmem %s3, 64
    %v259 = vld [vmem:[%s258] sm:$0xff]
    %v260 = vld [vmem:[%s258 + $0x8] sm:$0xff]
    %v261 = vld [vmem:[%s258 + $0x10] sm:$0xff]
    %v262 = vld [vmem:[%s258 + $0x18] sm:$0xff]
    %s263 = scalar_lea.vmem %s4, 2
    %v264 = vld [vmem:[%s263] sm:$0x1]
    %v266 = vlaneseq
    %v267 = vshrl.u32 %v266, 7
    %v268 = vsub.s32 0, %v267
    %v269 = vrot.slane %v264, %v268
    %v272 = vsel %vm50, %v35, 0
    %v275 = vsel %vm50, %v36, 0
    %v278 = vsel %vm50, %v37, 0
    %v281 = vsel %vm50, %v38, 0
    %283 = vmatprep.subr.mxu0 0.0
    %284 = vmatpush1.msra.mxu0 %v259
    %285 = vmatprep.subr.mxu0 0.0
    %286 = vmatpush1.msra.mxu0 %v260
    %287 = vmatprep.subr.mxu0 0.0
    %288 = vmatpush1.msra.mxu0 %v261
    %289 = vmatprep.subr.mxu0 0.0
    %290 = vmatpush1.msra.mxu0 %v262
    %291 = vmatprep.subr.mxu0 0.0
    %292 = vmatpush1.msra.mxu0 0.0
    %293 = vmatprep.subr.mxu0 0.0
    %294 = vmatpush1.msra.mxu0 0.0
    %295 = vmatprep.subr.mxu0 0.0
    %296 = vmatpush1.msra.mxu0 0.0
    %297 = vmatprep.subr.mxu0 0.0
    %298 = vmatpush1.msra.mxu0 0.0
    %299 = vmatprep.subr.mxu0 0.0
    %300 = vmatpush1.msra.mxu0 0.0
    %301 = vmatprep.subr.mxu0 0.0
    %302 = vmatpush1.msra.mxu0 0.0
    %303 = vmatprep.subr.mxu0 0.0
    %304 = vmatpush1.msra.mxu0 0.0
    %305 = vmatprep.subr.mxu0 0.0
    %306 = vmatpush1.msra.mxu0 0.0
    %307 = vmatprep.subr.mxu0 0.0
    %308 = vmatpush1.msra.mxu0 0.0
    %309 = vmatprep.subr.mxu0 0.0
    %310 = vmatpush1.msra.mxu0 0.0
    %311 = vmatprep.subr.mxu0 0.0
    %312 = vmatpush1.msra.mxu0 0.0
    %313 = vmatprep.subr.mxu0 0.0
    %314 = vmatpush1.msra.mxu0 0.0
    %315 = vmatprep.subr.mxu0 0.0
    %316 = vmatpush1.msra.mxu0 0.0
    %317 = vmatprep.subr.mxu0 0.0
    %318 = vmatpush1.msra.mxu0 0.0
    %319 = vmatprep.subr.mxu0 0.0
    %320 = vmatpush1.msra.mxu0 0.0
    %321 = vmatprep.subr.mxu0 0.0
    %322 = vmatpush1.msra.mxu0 0.0
    %323 = vmatprep.subr.mxu0 0.0
    %324 = vmatpush1.msra.mxu0 0.0
    %325 = vmatprep.subr.mxu0 0.0
    %326 = vmatpush1.msra.mxu0 0.0
    %327 = vmatprep.subr.mxu0 0.0
    %328 = vmatpush1.msra.mxu0 0.0
    %329 = vmatprep.subr.mxu0 0.0
    %330 = vmatpush1.msra.mxu0 0.0
    %331 = vmatprep.subr.mxu0 0.0
    %332 = vmatpush1.msra.mxu0 0.0
    %333 = vmatprep.subr.mxu0 0.0
    %334 = vmatpush1.msra.mxu0 0.0
    %335 = vmatprep.subr.mxu0 0.0
    %336 = vmatpush1.msra.mxu0 0.0
    %337 = vmatprep.subr.mxu0 0.0
    %338 = vmatpush1.msra.mxu0 0.0
    %339 = vmatprep.subr.mxu0 0.0
    %340 = vmatpush1.msra.mxu0 0.0
    %341 = vmatprep.subr.mxu0 0.0
    %342 = vmatpush1.msra.mxu0 0.0
    %343 = vmatprep.subr.mxu0 0.0
    %344 = vmatpush1.msra.mxu0 0.0
    %345 = vmatprep.subr.mxu0 0.0
    %346 = vmatpush1.msra.mxu0 0.0
    %347 = vmatprep.mubr.f32.mxu0 0.0
    %348 = vmatmul.mubr.f32.gmra.mrb[0].mxu0 %v272
    %v349 = vpop.f32.mrb[0].mxu0
    %v350 = vadd.f32 %v269, %v349
    %v351 = vpop.f32.mrb[0].mxu0
    %352 = vmatprep.mubr.f32.mxu0 0.0
    %353 = vmatmul.mubr.f32.gmra.mrb[0].mxu0 %v275
    %v354 = vpop.f32.mrb[0].mxu0
    %v355 = vadd.f32 %v269, %v354
    %v356 = vpop.f32.mrb[0].mxu0
    %357 = vmatprep.mubr.f32.mxu0 0.0
    %358 = vmatmul.mubr.f32.gmra.mrb[0].mxu0 %v278
    %v359 = vpop.f32.mrb[0].mxu0
    %v360 = vadd.f32 %v269, %v359
    %v361 = vpop.f32.mrb[0].mxu0
    %362 = vmatprep.mubr.f32.mxu0 0.0
    %363 = vmatmul.mubr.f32.gmra.mrb[0].mxu0 %v281
    %v364 = vpop.f32.mrb[0].mxu0
    %v365 = vadd.f32 %v269, %v364
    %v366 = vpop.f32.mrb[0].mxu0
    %367 = vdwg.mxu0
    %v368 = vmul.f32 %v130, 0.35355338
    %v369 = vmul.f32 %v135, 0.35355338
    %v370 = vmul.f32 %v140, 0.35355338
    %v371 = vmul.f32 %v145, 0.35355338
    %vm372 = vcmask 64512
    %v374 = vsel %vm372, %v368, 0
    %v377 = vsel %vm372, %v240, 0
    %379 = vmatprep.subr.mxu0 0.0
    %380 = vmatpush1.xpose.msra.mxu0 %v377
    %381 = vmatprep.subr.mxu0 0.0
    %382 = vmatpush1.xpose.msra.mxu0 0.0
    %383 = vmatprep.subr.mxu0 0.0
    %384 = vmatpush1.xpose.msra.mxu0 0.0
    %385 = vmatprep.subr.mxu0 0.0
    %386 = vmatpush1.xpose.msra.mxu0 0.0
    %387 = vmatprep.subr.mxu0 0.0
    %388 = vmatpush1.xpose.msra.mxu0 0.0
    %389 = vmatprep.subr.mxu0 0.0
    %390 = vmatpush1.xpose.msra.mxu0 0.0
    %391 = vmatprep.subr.mxu0 0.0
    %392 = vmatpush1.xpose.msra.mxu0 0.0
    %393 = vmatprep.subr.mxu0 0.0
    %394 = vmatpush1.xpose.msra.mxu0 0.0
    %395 = vmatprep.subr.mxu0 0.0
    %396 = vmatpush1.xpose.msra.mxu0 0.0
    %397 = vmatprep.subr.mxu0 0.0
    %398 = vmatpush1.xpose.msra.mxu0 0.0
    %399 = vmatprep.subr.mxu0 0.0
    %400 = vmatpush1.xpose.msra.mxu0 0.0
    %401 = vmatprep.subr.mxu0 0.0
    %402 = vmatpush1.xpose.msra.mxu0 0.0
    %403 = vmatprep.subr.mxu0 0.0
    %404 = vmatpush1.xpose.msra.mxu0 0.0
    %405 = vmatprep.subr.mxu0 0.0
    %406 = vmatpush1.xpose.msra.mxu0 0.0
    %407 = vmatprep.subr.mxu0 0.0
    %408 = vmatpush1.xpose.msra.mxu0 0.0
    %409 = vmatprep.subr.mxu0 0.0
    %410 = vmatpush1.xpose.msra.mxu0 0.0
    %411 = vmatprep.subr.mxu0 0.0
    %412 = vmatpush1.xpose.msra.mxu0 0.0
    %413 = vmatprep.subr.mxu0 0.0
    %414 = vmatpush1.xpose.msra.mxu0 0.0
    %415 = vmatprep.subr.mxu0 0.0
    %416 = vmatpush1.xpose.msra.mxu0 0.0
    %417 = vmatprep.subr.mxu0 0.0
    %418 = vmatpush1.xpose.msra.mxu0 0.0
    %419 = vmatprep.subr.mxu0 0.0
    %420 = vmatpush1.xpose.msra.mxu0 0.0
    %421 = vmatprep.subr.mxu0 0.0
    %422 = vmatpush1.xpose.msra.mxu0 0.0
    %423 = vmatprep.subr.mxu0 0.0
    %424 = vmatpush1.xpose.msra.mxu0 0.0
    %425 = vmatprep.subr.mxu0 0.0
    %426 = vmatpush1.xpose.msra.mxu0 0.0
    %427 = vmatprep.subr.mxu0 0.0
    %428 = vmatpush1.xpose.msra.mxu0 0.0
    %429 = vmatprep.subr.mxu0 0.0
    %430 = vmatpush1.xpose.msra.mxu0 0.0
    %431 = vmatprep.subr.mxu0 0.0
    %432 = vmatpush1.xpose.msra.mxu0 0.0
    %433 = vmatprep.subr.mxu0 0.0
    %434 = vmatpush1.xpose.msra.mxu0 0.0
    %435 = vmatprep.subr.mxu0 0.0
    %436 = vmatpush1.xpose.msra.mxu0 0.0
    %437 = vmatprep.subr.mxu0 0.0
    %438 = vmatpush1.xpose.msra.mxu0 0.0
    %439 = vmatprep.subr.mxu0 0.0
    %440 = vmatpush1.xpose.msra.mxu0 0.0
    %441 = vmatprep.subr.mxu0 0.0
    %442 = vmatpush1.xpose.msra.mxu0 0.0
    %443 = vmatprep.mubr.f32.mxu0 0.0
    %444 = vmatmul.mubr.f32.gmra.mrb[0].mxu0 %v374
    %v445 = vpop.f32.mrb[0].mxu0
    %v446 = vadd.f32 0.0, %v445
    %v447 = vpop.f32.mrb[0].mxu0
    %448 = vdwg.mxu0
    %v450 = vsel %vm372, %v369, 0
    %v453 = vsel %vm372, %v245, 0
    %455 = vmatprep.subr.mxu0 0.0
    %456 = vmatpush1.xpose.msra.mxu0 %v453
    %457 = vmatprep.subr.mxu0 0.0
    %458 = vmatpush1.xpose.msra.mxu0 0.0
    %459 = vmatprep.subr.mxu0 0.0
    %460 = vmatpush1.xpose.msra.mxu0 0.0
    %461 = vmatprep.subr.mxu0 0.0
    %462 = vmatpush1.xpose.msra.mxu0 0.0
    %463 = vmatprep.subr.mxu0 0.0
    %464 = vmatpush1.xpose.msra.mxu0 0.0
    %465 = vmatprep.subr.mxu0 0.0
    %466 = vmatpush1.xpose.msra.mxu0 0.0
    %467 = vmatprep.subr.mxu0 0.0
    %468 = vmatpush1.xpose.msra.mxu0 0.0
    %469 = vmatprep.subr.mxu0 0.0
    %470 = vmatpush1.xpose.msra.mxu0 0.0
    %471 = vmatprep.subr.mxu0 0.0
    %472 = vmatpush1.xpose.msra.mxu0 0.0
    %473 = vmatprep.subr.mxu0 0.0
    %474 = vmatpush1.xpose.msra.mxu0 0.0
    %475 = vmatprep.subr.mxu0 0.0
    %476 = vmatpush1.xpose.msra.mxu0 0.0
    %477 = vmatprep.subr.mxu0 0.0
    %478 = vmatpush1.xpose.msra.mxu0 0.0
    %479 = vmatprep.subr.mxu0 0.0
    %480 = vmatpush1.xpose.msra.mxu0 0.0
    %481 = vmatprep.subr.mxu0 0.0
    %482 = vmatpush1.xpose.msra.mxu0 0.0
    %483 = vmatprep.subr.mxu0 0.0
    %484 = vmatpush1.xpose.msra.mxu0 0.0
    %485 = vmatprep.subr.mxu0 0.0
    %486 = vmatpush1.xpose.msra.mxu0 0.0
    %487 = vmatprep.subr.mxu0 0.0
    %488 = vmatpush1.xpose.msra.mxu0 0.0
    %489 = vmatprep.subr.mxu0 0.0
    %490 = vmatpush1.xpose.msra.mxu0 0.0
    %491 = vmatprep.subr.mxu0 0.0
    %492 = vmatpush1.xpose.msra.mxu0 0.0
    %493 = vmatprep.subr.mxu0 0.0
    %494 = vmatpush1.xpose.msra.mxu0 0.0
    %495 = vmatprep.subr.mxu0 0.0
    %496 = vmatpush1.xpose.msra.mxu0 0.0
    %497 = vmatprep.subr.mxu0 0.0
    %498 = vmatpush1.xpose.msra.mxu0 0.0
    %499 = vmatprep.subr.mxu0 0.0
    %500 = vmatpush1.xpose.msra.mxu0 0.0
    %501 = vmatprep.subr.mxu0 0.0
    %502 = vmatpush1.xpose.msra.mxu0 0.0
    %503 = vmatprep.subr.mxu0 0.0
    %504 = vmatpush1.xpose.msra.mxu0 0.0
    %505 = vmatprep.subr.mxu0 0.0
    %506 = vmatpush1.xpose.msra.mxu0 0.0
    %507 = vmatprep.subr.mxu0 0.0
    %508 = vmatpush1.xpose.msra.mxu0 0.0
    %509 = vmatprep.subr.mxu0 0.0
    %510 = vmatpush1.xpose.msra.mxu0 0.0
    %511 = vmatprep.subr.mxu0 0.0
    %512 = vmatpush1.xpose.msra.mxu0 0.0
    %513 = vmatprep.subr.mxu0 0.0
    %514 = vmatpush1.xpose.msra.mxu0 0.0
    %515 = vmatprep.subr.mxu0 0.0
    %516 = vmatpush1.xpose.msra.mxu0 0.0
    %517 = vmatprep.subr.mxu0 0.0
    %518 = vmatpush1.xpose.msra.mxu0 0.0
    %519 = vmatprep.mubr.f32.mxu0 0.0
    %520 = vmatmul.mubr.f32.gmra.mrb[0].mxu0 %v450
    %v521 = vpop.f32.mrb[0].mxu0
    %v522 = vadd.f32 0.0, %v521
    %v523 = vpop.f32.mrb[0].mxu0
    %524 = vdwg.mxu0
    %v526 = vsel %vm372, %v370, 0
    %v529 = vsel %vm372, %v250, 0
    %531 = vmatprep.subr.mxu0 0.0
    %532 = vmatpush1.xpose.msra.mxu0 %v529
    %533 = vmatprep.subr.mxu0 0.0
    %534 = vmatpush1.xpose.msra.mxu0 0.0
    %535 = vmatprep.subr.mxu0 0.0
    %536 = vmatpush1.xpose.msra.mxu0 0.0
    %537 = vmatprep.subr.mxu0 0.0
    %538 = vmatpush1.xpose.msra.mxu0 0.0
    %539 = vmatprep.subr.mxu0 0.0
    %540 = vmatpush1.xpose.msra.mxu0 0.0
    %541 = vmatprep.subr.mxu0 0.0
    %542 = vmatpush1.xpose.msra.mxu0 0.0
    %543 = vmatprep.subr.mxu0 0.0
    %544 = vmatpush1.xpose.msra.mxu0 0.0
    %545 = vmatprep.subr.mxu0 0.0
    %546 = vmatpush1.xpose.msra.mxu0 0.0
    %547 = vmatprep.subr.mxu0 0.0
    %548 = vmatpush1.xpose.msra.mxu0 0.0
    %549 = vmatprep.subr.mxu0 0.0
    %550 = vmatpush1.xpose.msra.mxu0 0.0
    %551 = vmatprep.subr.mxu0 0.0
    %552 = vmatpush1.xpose.msra.mxu0 0.0
    %553 = vmatprep.subr.mxu0 0.0
    %554 = vmatpush1.xpose.msra.mxu0 0.0
    %555 = vmatprep.subr.mxu0 0.0
    %556 = vmatpush1.xpose.msra.mxu0 0.0
    %557 = vmatprep.subr.mxu0 0.0
    %558 = vmatpush1.xpose.msra.mxu0 0.0
    %559 = vmatprep.subr.mxu0 0.0
    %560 = vmatpush1.xpose.msra.mxu0 0.0
    %561 = vmatprep.subr.mxu0 0.0
    %562 = vmatpush1.xpose.msra.mxu0 0.0
    %563 = vmatprep.subr.mxu0 0.0
    %564 = vmatpush1.xpose.msra.mxu0 0.0
    %565 = vmatprep.subr.mxu0 0.0
    %566 = vmatpush1.xpose.msra.mxu0 0.0
    %567 = vmatprep.subr.mxu0 0.0
    %568 = vmatpush1.xpose.msra.mxu0 0.0
    %569 = vmatprep.subr.mxu0 0.0
    %570 = vmatpush1.xpose.msra.mxu0 0.0
    %571 = vmatprep.subr.mxu0 0.0
    %572 = vmatpush1.xpose.msra.mxu0 0.0
    %573 = vmatprep.subr.mxu0 0.0
    %574 = vmatpush1.xpose.msra.mxu0 0.0
    %575 = vmatprep.subr.mxu0 0.0
    %576 = vmatpush1.xpose.msra.mxu0 0.0
    %577 = vmatprep.subr.mxu0 0.0
    %578 = vmatpush1.xpose.msra.mxu0 0.0
    %579 = vmatprep.subr.mxu0 0.0
    %580 = vmatpush1.xpose.msra.mxu0 0.0
    %581 = vmatprep.subr.mxu0 0.0
    %582 = vmatpush1.xpose.msra.mxu0 0.0
    %583 = vmatprep.subr.mxu0 0.0
    %584 = vmatpush1.xpose.msra.mxu0 0.0
    %585 = vmatprep.subr.mxu0 0.0
    %586 = vmatpush1.xpose.msra.mxu0 0.0
    %587 = vmatprep.subr.mxu0 0.0
    %588 = vmatpush1.xpose.msra.mxu0 0.0
    %589 = vmatprep.subr.mxu0 0.0
    %590 = vmatpush1.xpose.msra.mxu0 0.0
    %591 = vmatprep.subr.mxu0 0.0
    %592 = vmatpush1.xpose.msra.mxu0 0.0
    %593 = vmatprep.subr.mxu0 0.0
    %594 = vmatpush1.xpose.msra.mxu0 0.0
    %595 = vmatprep.mubr.f32.mxu0 0.0
    %596 = vmatmul.mubr.f32.gmra.mrb[0].mxu0 %v526
    %v597 = vpop.f32.mrb[0].mxu0
    %v598 = vadd.f32 0.0, %v597
    %v599 = vpop.f32.mrb[0].mxu0
    %600 = vdwg.mxu0
    %v602 = vsel %vm372, %v371, 0
    %v605 = vsel %vm372, %v255, 0
    %607 = vmatprep.subr.mxu0 0.0
    %608 = vmatpush1.xpose.msra.mxu0 %v605
    %609 = vmatprep.subr.mxu0 0.0
    %610 = vmatpush1.xpose.msra.mxu0 0.0
    %611 = vmatprep.subr.mxu0 0.0
    %612 = vmatpush1.xpose.msra.mxu0 0.0
    %613 = vmatprep.subr.mxu0 0.0
    %614 = vmatpush1.xpose.msra.mxu0 0.0
    %615 = vmatprep.subr.mxu0 0.0
    %616 = vmatpush1.xpose.msra.mxu0 0.0
    %617 = vmatprep.subr.mxu0 0.0
    %618 = vmatpush1.xpose.msra.mxu0 0.0
    %619 = vmatprep.subr.mxu0 0.0
    %620 = vmatpush1.xpose.msra.mxu0 0.0
    %621 = vmatprep.subr.mxu0 0.0
    %622 = vmatpush1.xpose.msra.mxu0 0.0
    %623 = vmatprep.subr.mxu0 0.0
    %624 = vmatpush1.xpose.msra.mxu0 0.0
    %625 = vmatprep.subr.mxu0 0.0
    %626 = vmatpush1.xpose.msra.mxu0 0.0
    %627 = vmatprep.subr.mxu0 0.0
    %628 = vmatpush1.xpose.msra.mxu0 0.0
    %629 = vmatprep.subr.mxu0 0.0
    %630 = vmatpush1.xpose.msra.mxu0 0.0
    %631 = vmatprep.subr.mxu0 0.0
    %632 = vmatpush1.xpose.msra.mxu0 0.0
    %633 = vmatprep.subr.mxu0 0.0
    %634 = vmatpush1.xpose.msra.mxu0 0.0
    %635 = vmatprep.subr.mxu0 0.0
    %636 = vmatpush1.xpose.msra.mxu0 0.0
    %637 = vmatprep.subr.mxu0 0.0
    %638 = vmatpush1.xpose.msra.mxu0 0.0
    %639 = vmatprep.subr.mxu0 0.0
    %640 = vmatpush1.xpose.msra.mxu0 0.0
    %641 = vmatprep.subr.mxu0 0.0
    %642 = vmatpush1.xpose.msra.mxu0 0.0
    %643 = vmatprep.subr.mxu0 0.0
    %644 = vmatpush1.xpose.msra.mxu0 0.0
    %645 = vmatprep.subr.mxu0 0.0
    %646 = vmatpush1.xpose.msra.mxu0 0.0
    %647 = vmatprep.subr.mxu0 0.0
    %648 = vmatpush1.xpose.msra.mxu0 0.0
    %649 = vmatprep.subr.mxu0 0.0
    %650 = vmatpush1.xpose.msra.mxu0 0.0
    %651 = vmatprep.subr.mxu0 0.0
    %652 = vmatpush1.xpose.msra.mxu0 0.0
    %653 = vmatprep.subr.mxu0 0.0
    %654 = vmatpush1.xpose.msra.mxu0 0.0
    %655 = vmatprep.subr.mxu0 0.0
    %656 = vmatpush1.xpose.msra.mxu0 0.0
    %657 = vmatprep.subr.mxu0 0.0
    %658 = vmatpush1.xpose.msra.mxu0 0.0
    %659 = vmatprep.subr.mxu0 0.0
    %660 = vmatpush1.xpose.msra.mxu0 0.0
    %661 = vmatprep.subr.mxu0 0.0
    %662 = vmatpush1.xpose.msra.mxu0 0.0
    %663 = vmatprep.subr.mxu0 0.0
    %664 = vmatpush1.xpose.msra.mxu0 0.0
    %665 = vmatprep.subr.mxu0 0.0
    %666 = vmatpush1.xpose.msra.mxu0 0.0
    %667 = vmatprep.subr.mxu0 0.0
    %668 = vmatpush1.xpose.msra.mxu0 0.0
    %669 = vmatprep.subr.mxu0 0.0
    %670 = vmatpush1.xpose.msra.mxu0 0.0
    %671 = vmatprep.mubr.f32.mxu0 0.0
    %672 = vmatmul.mubr.f32.gmra.mrb[0].mxu0 %v602
    %v673 = vpop.f32.mrb[0].mxu0
    %v674 = vadd.f32 0.0, %v673
    %v675 = vpop.f32.mrb[0].mxu0
    %676 = vdwg.mxu0
    %v677 = vsel %vm372, %v446, -inf
    %678 = vmax.xlane.f32.xlu0 %v677
    %v679 = vpop.xlane.xlu0 %678
    %v680 = vsel %vm372, %v522, -inf
    %681 = vmax.xlane.f32.xlu0 %v680
    %v682 = vpop.xlane.xlu0 %681
    %v683 = vsel %vm372, %v598, -inf
    %684 = vmax.xlane.f32.xlu0 %v683
    %v685 = vpop.xlane.xlu0 %684
    %v686 = vsel %vm372, %v674, -inf
    %687 = vmax.xlane.f32.xlu0 %v686
    %v688 = vpop.xlane.xlu0 %687
    %v689 = vsub.f32 %v446, %v679
    %v690 = vsub.f32 %v522, %v682
    %v691 = vsub.f32 %v598, %v685
    %v692 = vsub.f32 %v674, %v688
    %v693 = vmul.f32 %v689, 1.442695
    %v694 = vpow.pop %v693
    %v695 = vmul.f32 %v690, 1.442695
    %v696 = vpow.pop %v695
    %v697 = vmul.f32 %v691, 1.442695
    %v698 = vpow.pop %v697
    %v699 = vmul.f32 %v692, 1.442695
    %v700 = vpow.pop %v699
    %v701 = vsel %vm372, %v694, 0.0
    %702 = vadd.xlane.f32.xlu0 %v701
    %v703 = vpop.xlane.xlu0 %702
    %v704 = vsel %vm372, %v696, 0.0
    %705 = vadd.xlane.f32.xlu0 %v704
    %v706 = vpop.xlane.xlu0 %705
    %v707 = vsel %vm372, %v698, 0.0
    %708 = vadd.xlane.f32.xlu0 %v707
    %v709 = vpop.xlane.xlu0 %708
    %v710 = vsel %vm372, %v700, 0.0
    %711 = vadd.xlane.f32.xlu0 %v710
    %v712 = vpop.xlane.xlu0 %711
    %v713 = vrcp.pop %v703
    %v714 = vrcp.pop %v706
    %v715 = vrcp.pop %v709
    %v716 = vrcp.pop %v712
    %v717 = vmul.f32 %v694, %v713
    %v718 = vmul.f32 %v696, %v714
    %v719 = vmul.f32 %v698, %v715
    %v720 = vmul.f32 %v700, %v716
    %v722 = vsel %vm372, %v717, 0
    %724 = vmatprep.subr.mxu0 0.0
    %725 = vmatpush1.msra.mxu0 %v350
    %726 = vmatprep.subr.mxu0 0.0
    %727 = vmatpush1.msra.mxu0 0.0
    %728 = vmatprep.subr.mxu0 0.0
    %729 = vmatpush1.msra.mxu0 0.0
    %730 = vmatprep.subr.mxu0 0.0
    %731 = vmatpush1.msra.mxu0 0.0
    %732 = vmatprep.subr.mxu0 0.0
    %733 = vmatpush1.msra.mxu0 0.0
    %734 = vmatprep.subr.mxu0 0.0
    %735 = vmatpush1.msra.mxu0 0.0
    %736 = vmatprep.subr.mxu0 0.0
    %737 = vmatpush1.msra.mxu0 0.0
    %738 = vmatprep.subr.mxu0 0.0
    %739 = vmatpush1.msra.mxu0 0.0
    %740 = vmatprep.subr.mxu0 0.0
    %741 = vmatpush1.msra.mxu0 0.0
    %742 = vmatprep.subr.mxu0 0.0
    %743 = vmatpush1.msra.mxu0 0.0
    %744 = vmatprep.subr.mxu0 0.0
    %745 = vmatpush1.msra.mxu0 0.0
    %746 = vmatprep.subr.mxu0 0.0
    %747 = vmatpush1.msra.mxu0 0.0
    %748 = vmatprep.subr.mxu0 0.0
    %749 = vmatpush1.msra.mxu0 0.0
    %750 = vmatprep.subr.mxu0 0.0
    %751 = vmatpush1.msra.mxu0 0.0
    %752 = vmatprep.subr.mxu0 0.0
    %753 = vmatpush1.msra.mxu0 0.0
    %754 = vmatprep.subr.mxu0 0.0
    %755 = vmatpush1.msra.mxu0 0.0
    %756 = vmatprep.subr.mxu0 0.0
    %757 = vmatpush1.msra.mxu0 0.0
    %758 = vmatprep.subr.mxu0 0.0
    %759 = vmatpush1.msra.mxu0 0.0
    %760 = vmatprep.subr.mxu0 0.0
    %761 = vmatpush1.msra.mxu0 0.0
    %762 = vmatprep.subr.mxu0 0.0
    %763 = vmatpush1.msra.mxu0 0.0
    %764 = vmatprep.subr.mxu0 0.0
    %765 = vmatpush1.msra.mxu0 0.0
    %766 = vmatprep.subr.mxu0 0.0
    %767 = vmatpush1.msra.mxu0 0.0
    %768 = vmatprep.subr.mxu0 0.0
    %769 = vmatpush1.msra.mxu0 0.0
    %770 = vmatprep.subr.mxu0 0.0
    %771 = vmatpush1.msra.mxu0 0.0
    %772 = vmatprep.subr.mxu0 0.0
    %773 = vmatpush1.msra.mxu0 0.0
    %774 = vmatprep.subr.mxu0 0.0
    %775 = vmatpush1.msra.mxu0 0.0
    %776 = vmatprep.subr.mxu0 0.0
    %777 = vmatpush1.msra.mxu0 0.0
    %778 = vmatprep.subr.mxu0 0.0
    %779 = vmatpush1.msra.mxu0 0.0
    %780 = vmatprep.subr.mxu0 0.0
    %781 = vmatpush1.msra.mxu0 0.0
    %782 = vmatprep.subr.mxu0 0.0
    %783 = vmatpush1.msra.mxu0 0.0
    %784 = vmatprep.subr.mxu0 0.0
    %785 = vmatpush1.msra.mxu0 0.0
    %786 = vmatprep.subr.mxu0 0.0
    %787 = vmatpush1.msra.mxu0 0.0
    %788 = vmatprep.mubr.f32.mxu0 0.0
    %789 = vmatmul.mubr.f32.gmra.mrb[0].mxu0 %v722
    %v790 = vpop.f32.mrb[0].mxu0
    %v791 = vadd.f32 0.0, %v790
    %v792 = vpop.f32.mrb[0].mxu0
    %793 = vdwg.mxu0
    %v795 = vsel %vm372, %v718, 0
    %797 = vmatprep.subr.mxu0 0.0
    %798 = vmatpush1.msra.mxu0 %v355
    %799 = vmatprep.subr.mxu0 0.0
    %800 = vmatpush1.msra.mxu0 0.0
    %801 = vmatprep.subr.mxu0 0.0
    %802 = vmatpush1.msra.mxu0 0.0
    %803 = vmatprep.subr.mxu0 0.0
    %804 = vmatpush1.msra.mxu0 0.0
    %805 = vmatprep.subr.mxu0 0.0
    %806 = vmatpush1.msra.mxu0 0.0
    %807 = vmatprep.subr.mxu0 0.0
    %808 = vmatpush1.msra.mxu0 0.0
    %809 = vmatprep.subr.mxu0 0.0
    %810 = vmatpush1.msra.mxu0 0.0
    %811 = vmatprep.subr.mxu0 0.0
    %812 = vmatpush1.msra.mxu0 0.0
    %813 = vmatprep.subr.mxu0 0.0
    %814 = vmatpush1.msra.mxu0 0.0
    %815 = vmatprep.subr.mxu0 0.0
    %816 = vmatpush1.msra.mxu0 0.0
    %817 = vmatprep.subr.mxu0 0.0
    %818 = vmatpush1.msra.mxu0 0.0
    %819 = vmatprep.subr.mxu0 0.0
    %820 = vmatpush1.msra.mxu0 0.0
    %821 = vmatprep.subr.mxu0 0.0
    %822 = vmatpush1.msra.mxu0 0.0
    %823 = vmatprep.subr.mxu0 0.0
    %824 = vmatpush1.msra.mxu0 0.0
    %825 = vmatprep.subr.mxu0 0.0
    %826 = vmatpush1.msra.mxu0 0.0
    %827 = vmatprep.subr.mxu0 0.0
    %828 = vmatpush1.msra.mxu0 0.0
    %829 = vmatprep.subr.mxu0 0.0
    %830 = vmatpush1.msra.mxu0 0.0
    %831 = vmatprep.subr.mxu0 0.0
    %832 = vmatpush1.msra.mxu0 0.0
    %833 = vmatprep.subr.mxu0 0.0
    %834 = vmatpush1.msra.mxu0 0.0
    %835 = vmatprep.subr.mxu0 0.0
    %836 = vmatpush1.msra.mxu0 0.0
    %837 = vmatprep.subr.mxu0 0.0
    %838 = vmatpush1.msra.mxu0 0.0
    %839 = vmatprep.subr.mxu0 0.0
    %840 = vmatpush1.msra.mxu0 0.0
    %841 = vmatprep.subr.mxu0 0.0
    %842 = vmatpush1.msra.mxu0 0.0
    %843 = vmatprep.subr.mxu0 0.0
    %844 = vmatpush1.msra.mxu0 0.0
    %845 = vmatprep.subr.mxu0 0.0
    %846 = vmatpush1.msra.mxu0 0.0
    %847 = vmatprep.subr.mxu0 0.0
    %848 = vmatpush1.msra.mxu0 0.0
    %849 = vmatprep.subr.mxu0 0.0
    %850 = vmatpush1.msra.mxu0 0.0
    %851 = vmatprep.subr.mxu0 0.0
    %852 = vmatpush1.msra.mxu0 0.0
    %853 = vmatprep.subr.mxu0 0.0
    %854 = vmatpush1.msra.mxu0 0.0
    %855 = vmatprep.subr.mxu0 0.0
    %856 = vmatpush1.msra.mxu0 0.0
    %857 = vmatprep.subr.mxu0 0.0
    %858 = vmatpush1.msra.mxu0 0.0
    %859 = vmatprep.subr.mxu0 0.0
    %860 = vmatpush1.msra.mxu0 0.0
    %861 = vmatprep.mubr.f32.mxu0 0.0
    %862 = vmatmul.mubr.f32.gmra.mrb[0].mxu0 %v795
    %v863 = vpop.f32.mrb[0].mxu0
    %v864 = vadd.f32 0.0, %v863
    %v865 = vpop.f32.mrb[0].mxu0
    %866 = vdwg.mxu0
    %v868 = vsel %vm372, %v719, 0
    %870 = vmatprep.subr.mxu0 0.0
    %871 = vmatpush1.msra.mxu0 %v360
    %872 = vmatprep.subr.mxu0 0.0
    %873 = vmatpush1.msra.mxu0 0.0
    %874 = vmatprep.subr.mxu0 0.0
    %875 = vmatpush1.msra.mxu0 0.0
    %876 = vmatprep.subr.mxu0 0.0
    %877 = vmatpush1.msra.mxu0 0.0
    %878 = vmatprep.subr.mxu0 0.0
    %879 = vmatpush1.msra.mxu0 0.0
    %880 = vmatprep.subr.mxu0 0.0
    %881 = vmatpush1.msra.mxu0 0.0
    %882 = vmatprep.subr.mxu0 0.0
    %883 = vmatpush1.msra.mxu0 0.0
    %884 = vmatprep.subr.mxu0 0.0
    %885 = vmatpush1.msra.mxu0 0.0
    %886 = vmatprep.subr.mxu0 0.0
    %887 = vmatpush1.msra.mxu0 0.0
    %888 = vmatprep.subr.mxu0 0.0
    %889 = vmatpush1.msra.mxu0 0.0
    %890 = vmatprep.subr.mxu0 0.0
    %891 = vmatpush1.msra.mxu0 0.0
    %892 = vmatprep.subr.mxu0 0.0
    %893 = vmatpush1.msra.mxu0 0.0
    %894 = vmatprep.subr.mxu0 0.0
    %895 = vmatpush1.msra.mxu0 0.0
    %896 = vmatprep.subr.mxu0 0.0
    %897 = vmatpush1.msra.mxu0 0.0
    %898 = vmatprep.subr.mxu0 0.0
    %899 = vmatpush1.msra.mxu0 0.0
    %900 = vmatprep.subr.mxu0 0.0
    %901 = vmatpush1.msra.mxu0 0.0
    %902 = vmatprep.subr.mxu0 0.0
    %903 = vmatpush1.msra.mxu0 0.0
    %904 = vmatprep.subr.mxu0 0.0
    %905 = vmatpush1.msra.mxu0 0.0
    %906 = vmatprep.subr.mxu0 0.0
    %907 = vmatpush1.msra.mxu0 0.0
    %908 = vmatprep.subr.mxu0 0.0
    %909 = vmatpush1.msra.mxu0 0.0
    %910 = vmatprep.subr.mxu0 0.0
    %911 = vmatpush1.msra.mxu0 0.0
    %912 = vmatprep.subr.mxu0 0.0
    %913 = vmatpush1.msra.mxu0 0.0
    %914 = vmatprep.subr.mxu0 0.0
    %915 = vmatpush1.msra.mxu0 0.0
    %916 = vmatprep.subr.mxu0 0.0
    %917 = vmatpush1.msra.mxu0 0.0
    %918 = vmatprep.subr.mxu0 0.0
    %919 = vmatpush1.msra.mxu0 0.0
    %920 = vmatprep.subr.mxu0 0.0
    %921 = vmatpush1.msra.mxu0 0.0
    %922 = vmatprep.subr.mxu0 0.0
    %923 = vmatpush1.msra.mxu0 0.0
    %924 = vmatprep.subr.mxu0 0.0
    %925 = vmatpush1.msra.mxu0 0.0
    %926 = vmatprep.subr.mxu0 0.0
    %927 = vmatpush1.msra.mxu0 0.0
    %928 = vmatprep.subr.mxu0 0.0
    %929 = vmatpush1.msra.mxu0 0.0
    %930 = vmatprep.subr.mxu0 0.0
    %931 = vmatpush1.msra.mxu0 0.0
    %932 = vmatprep.subr.mxu0 0.0
    %933 = vmatpush1.msra.mxu0 0.0
    %934 = vmatprep.mubr.f32.mxu0 0.0
    %935 = vmatmul.mubr.f32.gmra.mrb[0].mxu0 %v868
    %v936 = vpop.f32.mrb[0].mxu0
    %v937 = vadd.f32 0.0, %v936
    %v938 = vpop.f32.mrb[0].mxu0
    %939 = vdwg.mxu0
    %v941 = vsel %vm372, %v720, 0
    %943 = vmatprep.subr.mxu0 0.0
    %944 = vmatpush1.msra.mxu0 %v365
    %945 = vmatprep.subr.mxu0 0.0
    %946 = vmatpush1.msra.mxu0 0.0
    %947 = vmatprep.subr.mxu0 0.0
    %948 = vmatpush1.msra.mxu0 0.0
    %949 = vmatprep.subr.mxu0 0.0
    %950 = vmatpush1.msra.mxu0 0.0
    %951 = vmatprep.subr.mxu0 0.0
    %952 = vmatpush1.msra.mxu0 0.0
    %953 = vmatprep.subr.mxu0 0.0
    %954 = vmatpush1.msra.mxu0 0.0
    %955 = vmatprep.subr.mxu0 0.0
    %956 = vmatpush1.msra.mxu0 0.0
    %957 = vmatprep.subr.mxu0 0.0
    %958 = vmatpush1.msra.mxu0 0.0
    %959 = vmatprep.subr.mxu0 0.0
    %960 = vmatpush1.msra.mxu0 0.0
    %961 = vmatprep.subr.mxu0 0.0
    %962 = vmatpush1.msra.mxu0 0.0
    %963 = vmatprep.subr.mxu0 0.0
    %964 = vmatpush1.msra.mxu0 0.0
    %965 = vmatprep.subr.mxu0 0.0
    %966 = vmatpush1.msra.mxu0 0.0
    %967 = vmatprep.subr.mxu0 0.0
    %968 = vmatpush1.msra.mxu0 0.0
    %969 = vmatprep.subr.mxu0 0.0
    %970 = vmatpush1.msra.mxu0 0.0
    %971 = vmatprep.subr.mxu0 0.0
    %972 = vmatpush1.msra.mxu0 0.0
    %973 = vmatprep.subr.mxu0 0.0
    %974 = vmatpush1.msra.mxu0 0.0
    %975 = vmatprep.subr.mxu0 0.0
    %976 = vmatpush1.msra.mxu0 0.0
    %977 = vmatprep.subr.mxu0 0.0
    %978 = vmatpush1.msra.mxu0 0.0
    %979 = vmatprep.subr.mxu0 0.0
    %980 = vmatpush1.msra.mxu0 0.0
    %981 = vmatprep.subr.mxu0 0.0
    %982 = vmatpush1.msra.mxu0 0.0
    %983 = vmatprep.subr.mxu0 0.0
    %984 = vmatpush1.msra.mxu0 0.0
    %985 = vmatprep.subr.mxu0 0.0
    %986 = vmatpush1.msra.mxu0 0.0
    %987 = vmatprep.subr.mxu0 0.0
    %988 = vmatpush1.msra.mxu0 0.0
    %989 = vmatprep.subr.mxu0 0.0
    %990 = vmatpush1.msra.mxu0 0.0
    %991 = vmatprep.subr.mxu0 0.0
    %992 = vmatpush1.msra.mxu0 0.0
    %993 = vmatprep.subr.mxu0 0.0
    %994 = vmatpush1.msra.mxu0 0.0
    %995 = vmatprep.subr.mxu0 0.0
    %996 = vmatpush1.msra.mxu0 0.0
    %997 = vmatprep.subr.mxu0 0.0
    %998 = vmatpush1.msra.mxu0 0.0
    %999 = vmatprep.subr.mxu0 0.0
    %1000 = vmatpush1.msra.mxu0 0.0
    %1001 = vmatprep.subr.mxu0 0.0
    %1002 = vmatpush1.msra.mxu0 0.0
    %1003 = vmatprep.subr.mxu0 0.0
    %1004 = vmatpush1.msra.mxu0 0.0
    %1005 = vmatprep.subr.mxu0 0.0
    %1006 = vmatpush1.msra.mxu0 0.0
    %1007 = vmatprep.mubr.f32.mxu0 0.0
    %1008 = vmatmul.mubr.f32.gmra.mrb[0].mxu0 %v941
    %v1009 = vpop.f32.mrb[0].mxu0
    %v1010 = vadd.f32 0.0, %v1009
    %v1011 = vpop.f32.mrb[0].mxu0
    %1012 = vdwg.mxu0
    %v1013 = vld [vmem:[%s5] sm:$0xff]
    %v1014 = vld [vmem:[%s5 + $0x8] sm:$0xff]
    %v1015 = vld [vmem:[%s5 + $0x10] sm:$0xff]
    %v1016 = vld [vmem:[%s5 + $0x18] sm:$0xff]
    %v1018 = vsel %vm372, %v791, 0
    %1020 = vmatprep.subr.mxu0 0.0
    %1021 = vmatpush1.msra.mxu0 %v1013
    %1022 = vmatprep.subr.mxu0 0.0
    %1023 = vmatpush1.msra.mxu0 0.0
    %1024 = vmatprep.subr.mxu0 0.0
    %1025 = vmatpush1.msra.mxu0 0.0
    %1026 = vmatprep.subr.mxu0 0.0
    %1027 = vmatpush1.msra.mxu0 0.0
    %1028 = vmatprep.subr.mxu0 0.0
    %1029 = vmatpush1.msra.mxu0 0.0
    %1030 = vmatprep.subr.mxu0 0.0
    %1031 = vmatpush1.msra.mxu0 0.0
    %1032 = vmatprep.subr.mxu0 0.0
    %1033 = vmatpush1.msra.mxu0 0.0
    %1034 = vmatprep.subr.mxu0 0.0
    %1035 = vmatpush1.msra.mxu0 0.0
    %1036 = vmatprep.subr.mxu0 0.0
    %1037 = vmatpush1.msra.mxu0 0.0
    %1038 = vmatprep.subr.mxu0 0.0
    %1039 = vmatpush1.msra.mxu0 0.0
    %1040 = vmatprep.subr.mxu0 0.0
    %1041 = vmatpush1.msra.mxu0 0.0
    %1042 = vmatprep.subr.mxu0 0.0
    %1043 = vmatpush1.msra.mxu0 0.0
    %1044 = vmatprep.subr.mxu0 0.0
    %1045 = vmatpush1.msra.mxu0 0.0
    %1046 = vmatprep.subr.mxu0 0.0
    %1047 = vmatpush1.msra.mxu0 0.0
    %1048 = vmatprep.subr.mxu0 0.0
    %1049 = vmatpush1.msra.mxu0 0.0
    %1050 = vmatprep.subr.mxu0 0.0
    %1051 = vmatpush1.msra.mxu0 0.0
    %1052 = vmatprep.subr.mxu0 0.0
    %1053 = vmatpush1.msra.mxu0 0.0
    %1054 = vmatprep.subr.mxu0 0.0
    %1055 = vmatpush1.msra.mxu0 0.0
    %1056 = vmatprep.subr.mxu0 0.0
    %1057 = vmatpush1.msra.mxu0 0.0
    %1058 = vmatprep.subr.mxu0 0.0
    %1059 = vmatpush1.msra.mxu0 0.0
    %1060 = vmatprep.subr.mxu0 0.0
    %1061 = vmatpush1.msra.mxu0 0.0
    %1062 = vmatprep.subr.mxu0 0.0
    %1063 = vmatpush1.msra.mxu0 0.0
    %1064 = vmatprep.subr.mxu0 0.0
    %1065 = vmatpush1.msra.mxu0 0.0
    %1066 = vmatprep.subr.mxu0 0.0
    %1067 = vmatpush1.msra.mxu0 0.0
    %1068 = vmatprep.subr.mxu0 0.0
    %1069 = vmatpush1.msra.mxu0 0.0
    %1070 = vmatprep.subr.mxu0 0.0
    %1071 = vmatpush1.msra.mxu0 0.0
    %1072 = vmatprep.subr.mxu0 0.0
    %1073 = vmatpush1.msra.mxu0 0.0
    %1074 = vmatprep.subr.mxu0 0.0
    %1075 = vmatpush1.msra.mxu0 0.0
    %1076 = vmatprep.subr.mxu0 0.0
    %1077 = vmatpush1.msra.mxu0 0.0
    %1078 = vmatprep.subr.mxu0 0.0
    %1079 = vmatpush1.msra.mxu0 0.0
    %1080 = vmatprep.subr.mxu0 0.0
    %1081 = vmatpush1.msra.mxu0 0.0
    %1082 = vmatprep.subr.mxu0 0.0
    %1083 = vmatpush1.msra.mxu0 0.0
    %1084 = vmatprep.mubr.f32.mxu0 0.0
    %1085 = vmatmul.mubr.f32.gmra.mrb[0].mxu0 %v1018
    %v1086 = vpop.f32.mrb[0].mxu0
    %v1087 = vadd.f32 0.0, %v1086
    %v1088 = vpop.f32.mrb[0].mxu0
    %1089 = vdwg.mxu0
    %v1091 = vsel %vm372, %v864, 0
    %1093 = vmatprep.subr.mxu0 0.0
    %1094 = vmatpush1.msra.mxu0 %v1014
    %1095 = vmatprep.subr.mxu0 0.0
    %1096 = vmatpush1.msra.mxu0 0.0
    %1097 = vmatprep.subr.mxu0 0.0
    %1098 = vmatpush1.msra.mxu0 0.0
    %1099 = vmatprep.subr.mxu0 0.0
    %1100 = vmatpush1.msra.mxu0 0.0
    %1101 = vmatprep.subr.mxu0 0.0
    %1102 = vmatpush1.msra.mxu0 0.0
    %1103 = vmatprep.subr.mxu0 0.0
    %1104 = vmatpush1.msra.mxu0 0.0
    %1105 = vmatprep.subr.mxu0 0.0
    %1106 = vmatpush1.msra.mxu0 0.0
    %1107 = vmatprep.subr.mxu0 0.0
    %1108 = vmatpush1.msra.mxu0 0.0
    %1109 = vmatprep.subr.mxu0 0.0
    %1110 = vmatpush1.msra.mxu0 0.0
    %1111 = vmatprep.subr.mxu0 0.0
    %1112 = vmatpush1.msra.mxu0 0.0
    %1113 = vmatprep.subr.mxu0 0.0
    %1114 = vmatpush1.msra.mxu0 0.0
    %1115 = vmatprep.subr.mxu0 0.0
    %1116 = vmatpush1.msra.mxu0 0.0
    %1117 = vmatprep.subr.mxu0 0.0
    %1118 = vmatpush1.msra.mxu0 0.0
    %1119 = vmatprep.subr.mxu0 0.0
    %1120 = vmatpush1.msra.mxu0 0.0
    %1121 = vmatprep.subr.mxu0 0.0
    %1122 = vmatpush1.msra.mxu0 0.0
    %1123 = vmatprep.subr.mxu0 0.0
    %1124 = vmatpush1.msra.mxu0 0.0
    %1125 = vmatprep.subr.mxu0 0.0
    %1126 = vmatpush1.msra.mxu0 0.0
    %1127 = vmatprep.subr.mxu0 0.0
    %1128 = vmatpush1.msra.mxu0 0.0
    %1129 = vmatprep.subr.mxu0 0.0
    %1130 = vmatpush1.msra.mxu0 0.0
    %1131 = vmatprep.subr.mxu0 0.0
    %1132 = vmatpush1.msra.mxu0 0.0
    %1133 = vmatprep.subr.mxu0 0.0
    %1134 = vmatpush1.msra.mxu0 0.0
    %1135 = vmatprep.subr.mxu0 0.0
    %1136 = vmatpush1.msra.mxu0 0.0
    %1137 = vmatprep.subr.mxu0 0.0
    %1138 = vmatpush1.msra.mxu0 0.0
    %1139 = vmatprep.subr.mxu0 0.0
    %1140 = vmatpush1.msra.mxu0 0.0
    %1141 = vmatprep.subr.mxu0 0.0
    %1142 = vmatpush1.msra.mxu0 0.0
    %1143 = vmatprep.subr.mxu0 0.0
    %1144 = vmatpush1.msra.mxu0 0.0
    %1145 = vmatprep.subr.mxu0 0.0
    %1146 = vmatpush1.msra.mxu0 0.0
    %1147 = vmatprep.subr.mxu0 0.0
    %1148 = vmatpush1.msra.mxu0 0.0
    %1149 = vmatprep.subr.mxu0 0.0
    %1150 = vmatpush1.msra.mxu0 0.0
    %1151 = vmatprep.subr.mxu0 0.0
    %1152 = vmatpush1.msra.mxu0 0.0
    %1153 = vmatprep.subr.mxu0 0.0
    %1154 = vmatpush1.msra.mxu0 0.0
    %1155 = vmatprep.subr.mxu0 0.0
    %1156 = vmatpush1.msra.mxu0 0.0
    %1157 = vmatprep.mubr.f32.mxu0 0.0
    %1158 = vmatmul.mubr.f32.gmra.mrb[0].mxu0 %v1091
    %v1159 = vpop.f32.mrb[0].mxu0
    %v1160 = vadd.f32 0.0, %v1159
    %v1161 = vpop.f32.mrb[0].mxu0
    %1162 = vdwg.mxu0
    %v1164 = vsel %vm372, %v937, 0
    %1166 = vmatprep.subr.mxu0 0.0
    %1167 = vmatpush1.msra.mxu0 %v1015
    %1168 = vmatprep.subr.mxu0 0.0
    %1169 = vmatpush1.msra.mxu0 0.0
    %1170 = vmatprep.subr.mxu0 0.0
    %1171 = vmatpush1.msra.mxu0 0.0
    %1172 = vmatprep.subr.mxu0 0.0
    %1173 = vmatpush1.msra.mxu0 0.0
    %1174 = vmatprep.subr.mxu0 0.0
    %1175 = vmatpush1.msra.mxu0 0.0
    %1176 = vmatprep.subr.mxu0 0.0
    %1177 = vmatpush1.msra.mxu0 0.0
    %1178 = vmatprep.subr.mxu0 0.0
    %1179 = vmatpush1.msra.mxu0 0.0
    %1180 = vmatprep.subr.mxu0 0.0
    %1181 = vmatpush1.msra.mxu0 0.0
    %1182 = vmatprep.subr.mxu0 0.0
    %1183 = vmatpush1.msra.mxu0 0.0
    %1184 = vmatprep.subr.mxu0 0.0
    %1185 = vmatpush1.msra.mxu0 0.0
    %1186 = vmatprep.subr.mxu0 0.0
    %1187 = vmatpush1.msra.mxu0 0.0
    %1188 = vmatprep.subr.mxu0 0.0
    %1189 = vmatpush1.msra.mxu0 0.0
    %1190 = vmatprep.subr.mxu0 0.0
    %1191 = vmatpush1.msra.mxu0 0.0
    %1192 = vmatprep.subr.mxu0 0.0
    %1193 = vmatpush1.msra.mxu0 0.0
    %1194 = vmatprep.subr.mxu0 0.0
    %1195 = vmatpush1.msra.mxu0 0.0
    %1196 = vmatprep.subr.mxu0 0.0
    %1197 = vmatpush1.msra.mxu0 0.0
    %1198 = vmatprep.subr.mxu0 0.0
    %1199 = vmatpush1.msra.mxu0 0.0
    %1200 = vmatprep.subr.mxu0 0.0
    %1201 = vmatpush1.msra.mxu0 0.0
    %1202 = vmatprep.subr.mxu0 0.0
    %1203 = vmatpush1.msra.mxu0 0.0
    %1204 = vmatprep.subr.mxu0 0.0
    %1205 = vmatpush1.msra.mxu0 0.0
    %1206 = vmatprep.subr.mxu0 0.0
    %1207 = vmatpush1.msra.mxu0 0.0
    %1208 = vmatprep.subr.mxu0 0.0
    %1209 = vmatpush1.msra.mxu0 0.0
    %1210 = vmatprep.subr.mxu0 0.0
    %1211 = vmatpush1.msra.mxu0 0.0
    %1212 = vmatprep.subr.mxu0 0.0
    %1213 = vmatpush1.msra.mxu0 0.0
    %1214 = vmatprep.subr.mxu0 0.0
    %1215 = vmatpush1.msra.mxu0 0.0
    %1216 = vmatprep.subr.mxu0 0.0
    %1217 = vmatpush1.msra.mxu0 0.0
    %1218 = vmatprep.subr.mxu0 0.0
    %1219 = vmatpush1.msra.mxu0 0.0
    %1220 = vmatprep.subr.mxu0 0.0
    %1221 = vmatpush1.msra.mxu0 0.0
    %1222 = vmatprep.subr.mxu0 0.0
    %1223 = vmatpush1.msra.mxu0 0.0
    %1224 = vmatprep.subr.mxu0 0.0
    %1225 = vmatpush1.msra.mxu0 0.0
    %1226 = vmatprep.subr.mxu0 0.0
    %1227 = vmatpush1.msra.mxu0 0.0
    %1228 = vmatprep.subr.mxu0 0.0
    %1229 = vmatpush1.msra.mxu0 0.0
    %1230 = vmatprep.mubr.f32.mxu0 0.0
    %1231 = vmatmul.mubr.f32.gmra.mrb[0].mxu0 %v1164
    %v1232 = vpop.f32.mrb[0].mxu0
    %v1233 = vadd.f32 0.0, %v1232
    %v1234 = vpop.f32.mrb[0].mxu0
    %1235 = vdwg.mxu0
    %v1237 = vsel %vm372, %v1010, 0
    %1239 = vmatprep.subr.mxu0 0.0
    %1240 = vmatpush1.msra.mxu0 %v1016
    %1241 = vmatprep.subr.mxu0 0.0
    %1242 = vmatpush1.msra.mxu0 0.0
    %1243 = vmatprep.subr.mxu0 0.0
    %1244 = vmatpush1.msra.mxu0 0.0
    %1245 = vmatprep.subr.mxu0 0.0
    %1246 = vmatpush1.msra.mxu0 0.0
    %1247 = vmatprep.subr.mxu0 0.0
    %1248 = vmatpush1.msra.mxu0 0.0
    %1249 = vmatprep.subr.mxu0 0.0
    %1250 = vmatpush1.msra.mxu0 0.0
    %1251 = vmatprep.subr.mxu0 0.0
    %1252 = vmatpush1.msra.mxu0 0.0
    %1253 = vmatprep.subr.mxu0 0.0
    %1254 = vmatpush1.msra.mxu0 0.0
    %1255 = vmatprep.subr.mxu0 0.0
    %1256 = vmatpush1.msra.mxu0 0.0
    %1257 = vmatprep.subr.mxu0 0.0
    %1258 = vmatpush1.msra.mxu0 0.0
    %1259 = vmatprep.subr.mxu0 0.0
    %1260 = vmatpush1.msra.mxu0 0.0
    %1261 = vmatprep.subr.mxu0 0.0
    %1262 = vmatpush1.msra.mxu0 0.0
    %1263 = vmatprep.subr.mxu0 0.0
    %1264 = vmatpush1.msra.mxu0 0.0
    %1265 = vmatprep.subr.mxu0 0.0
    %1266 = vmatpush1.msra.mxu0 0.0
    %1267 = vmatprep.subr.mxu0 0.0
    %1268 = vmatpush1.msra.mxu0 0.0
    %1269 = vmatprep.subr.mxu0 0.0
    %1270 = vmatpush1.msra.mxu0 0.0
    %1271 = vmatprep.subr.mxu0 0.0
    %1272 = vmatpush1.msra.mxu0 0.0
    %1273 = vmatprep.subr.mxu0 0.0
    %1274 = vmatpush1.msra.mxu0 0.0
    %1275 = vmatprep.subr.mxu0 0.0
    %1276 = vmatpush1.msra.mxu0 0.0
    %1277 = vmatprep.subr.mxu0 0.0
    %1278 = vmatpush1.msra.mxu0 0.0
    %1279 = vmatprep.subr.mxu0 0.0
    %1280 = vmatpush1.msra.mxu0 0.0
    %1281 = vmatprep.subr.mxu0 0.0
    %1282 = vmatpush1.msra.mxu0 0.0
    %1283 = vmatprep.subr.mxu0 0.0
    %1284 = vmatpush1.msra.mxu0 0.0
    %1285 = vmatprep.subr.mxu0 0.0
    %1286 = vmatpush1.msra.mxu0 0.0
    %1287 = vmatprep.subr.mxu0 0.0
    %1288 = vmatpush1.msra.mxu0 0.0
    %1289 = vmatprep.subr.mxu0 0.0
    %1290 = vmatpush1.msra.mxu0 0.0
    %1291 = vmatprep.subr.mxu0 0.0
    %1292 = vmatpush1.msra.mxu0 0.0
    %1293 = vmatprep.subr.mxu0 0.0
    %1294 = vmatpush1.msra.mxu0 0.0
    %1295 = vmatprep.subr.mxu0 0.0
    %1296 = vmatpush1.msra.mxu0 0.0
    %1297 = vmatprep.subr.mxu0 0.0
    %1298 = vmatpush1.msra.mxu0 0.0
    %1299 = vmatprep.subr.mxu0 0.0
    %1300 = vmatpush1.msra.mxu0 0.0
    %1301 = vmatprep.subr.mxu0 0.0
    %1302 = vmatpush1.msra.mxu0 0.0
    %1303 = vmatprep.mubr.f32.mxu0 0.0
    %1304 = vmatmul.mubr.f32.gmra.mrb[0].mxu0 %v1237
    %v1305 = vpop.f32.mrb[0].mxu0
    %v1306 = vadd.f32 0.0, %v1305
    %v1307 = vpop.f32.mrb[0].mxu0
    %1308 = vdwg.mxu0
    %v1309 = vsel %vm50, %v1087, 0.0
    %v1310 = vsel %vm50, %v1160, 0.0
    %v1311 = vadd.f32 %v1309, %v1310
    %v1312 = vsel %vm50, %v1233, 0.0
    %v1313 = vadd.f32 %v1311, %v1312
    %v1314 = vsel %vm50, %v1306, 0.0
    %v1315 = vadd.f32 %v1313, %v1314
    %v1316 = vld [vmem:[%s6] sm:$0x1]
    %v1318 = vlaneseq
    %v1319 = vshrl.u32 %v1318, 7
    %v1320 = vsub.s32 0, %v1319
    %v1321 = vrot.slane %v1316, %v1320
    %v1323 = vadd.f32 %v1315, %v1321
    %1324 = vst.msk [vmem:[#allocation2] sm:$0xff] %vm50, %v1323
    // Predicated region
    $region30: #{tpu_custom_call.1} parent=1 // pred_check
      _
    $region31: #{tpu_custom_call.1} parent=1 // pred_check_branch
      %1326 = sbr.rel (0) target = $region33
    $region32: #{tpu_custom_call.1} parent=1 // pred_region
      %s1328 = ssub.s32 128, 128
      %1329 = vsyncadd [#allocation3], %s1328
      %s1331 = sshll.u32 [#allocation2], 4
      %s1332 = int_to_ptr.vmem [resolvable:$true] %s1331
      %1334 = dma.vmem_to_hbm [thread:$0]  %s1332, 128, %s7, [#allocation3]
    $region33: #{tpu_custom_call.1} parent=1 // pred_fallthru
      _
    // Predicated region
    $region34: #{tpu_custom_call.1} parent=1 // pred_check
      _
    $region35: #{tpu_custom_call.1} parent=1 // pred_check_branch
      %1336 = sbr.rel (0) target = $region37
    $region36: #{tpu_custom_call.1} parent=1 // pred_region
      %1337 = dma.done [#allocation3], 128
    $region37: #{tpu_custom_call.1} parent=1 // pred_fallthru
      _
    %1338 = vsyncpa [#allocation3], 1

</llo_original>
